<compile_context>
chip_gen: v6e
topology: v6e:2x2x1
jax: 0.10.0
libtpu: 0.0.40
codegen_flags: <defaults>
</compile_context>

<pallas_src>
import functools
import math

import jax
import jax.numpy as jnp
from jax.experimental import pallas as pl
from jax.experimental.pallas import tpu as pltpu


def _denoiser_kernel(
    t_ref, x_ref, fw_ref,
    wt1t_ref, wt1s_ref, wt1c_ref, bt1_ref, wt2_ref, bt2_ref,
    wp_ref, bp_ref,
    w0_ref, b0_ref,
    lng_ref, lnb_ref, wr_ref, br_ref,
    lnfg_ref, lnfb_ref, wf_ref, bf_ref,
    out_ref,
    *, num_layers: int, eps: float,
):
    f32 = jnp.float32
    two_pi = 2.0 * math.pi

    def layer_norm(v, g, b):
        mu = jnp.mean(v, axis=-1, keepdims=True)
        var = jnp.mean(jnp.square(v - mu), axis=-1, keepdims=True)
        return (v - mu) * jax.lax.rsqrt(var + eps) * g + b

    # ---- fused time-embedding prologue (RandomOrLearnedSinusoidalPosEmb -> Linear -> SiLU -> Linear)
    t = t_ref[...].astype(f32)                        # (TB, 1)
    phase = (t * fw_ref[...]) * two_pi                # (TB, half); same fp op order as reference
    s = jnp.sin(phase)
    c = jnp.cos(phase)
    # Fourier features are [t | sin | cos]; instead of a lane-shuffling concatenate, fold the
    # t column into a broadcast multiply and feed sin/cos through split weight-row dots.
    h1 = (t * wt1t_ref[...]
          + jnp.dot(s, wt1s_ref[...], preferred_element_type=f32)
          + jnp.dot(c, wt1c_ref[...], preferred_element_type=f32)
          + bt1_ref[...])
    h1 = h1 * (1.0 / (1.0 + jnp.exp(-h1)))            # SiLU
    te = jnp.dot(h1, wt2_ref[...], preferred_element_type=f32) + bt2_ref[...]    # (TB, E)

    # ---- proj(x) + time embedding -----------------------------------------------------------
    z = jnp.dot(x_ref[...].astype(f32), wp_ref[...],
                preferred_element_type=f32) + bp_ref[...] + te                    # (TB, E)

    # ---- ResidualMLP: Linear -> [x + Linear(relu(LN(x)))] * L -> LN -> relu -> final Linear --
    h = jnp.dot(z, w0_ref[...], preferred_element_type=f32) + b0_ref[...]         # (TB, H)
    for i in range(num_layers):                       # static unroll over a small fixed depth
        a = jnp.maximum(layer_norm(h, lng_ref[i], lnb_ref[i]), 0.0)
        h = h + jnp.dot(a, wr_ref[i], preferred_element_type=f32) + br_ref[i]
    a = jnp.maximum(layer_norm(h, lnfg_ref[...], lnfb_ref[...]), 0.0)
    out_ref[...] = (jnp.dot(a, wf_ref[...], preferred_element_type=f32)
                    + bf_ref[...]).astype(out_ref.dtype)


def residual_mlp_denoiser_forward(traj, act, timesteps, params):
    """Pallas TPU forward of ResidualMLPDenoiser (random Fourier time conditioning)."""
    b, hor, d = traj.shape
    # Layout glue (pure reshuffle, left to XLA): cat(traj, act) along features, flatten time.
    x = jnp.concatenate([traj, act], axis=-1).reshape(b, -1).astype(jnp.float32)
    t = timesteps.reshape(b, 1).astype(jnp.float32)

    din = x.shape[-1]
    E = params["wt2"].shape[0]
    H = params["w0"].shape[1]
    L = params["wr"].shape[0]
    dout = params["wf"].shape[1]
    half = params["fourier_w"].shape[0]

    # --- batch tiling: multiples of 8, one tile per grid step on a "parallel" axis ---
    tb = 128 if b > 128 else max(8, ((b + 7) // 8) * 8)
    b_pad = ((b + tb - 1) // tb) * tb
    if b_pad != b:
        x = jnp.pad(x, ((0, b_pad - b), (0, 0)))
        t = jnp.pad(t, ((0, b_pad - b), (0, 0)))
    grid = (b_pad // tb,)

    def row(v):
        return v.reshape(1, -1)

    # Constant tables / weight views prepared once in the wrapper (not per grid step).
    fw = params["fourier_w"].reshape(1, half)
    wt1 = params["wt1"]                               # (1 + 2*half, E); rows: [t | sin | cos]
    weight_inputs = [
        fw,
        wt1[0:1, :], wt1[1:1 + half, :], wt1[1 + half:, :], row(params["bt1"]),
        params["wt2"], row(params["bt2"]),
        params["wp"], row(params["bp"]),
        params["w0"], row(params["b0"]),
        params["ln_g"].reshape(L, 1, H), params["ln_b"].reshape(L, 1, H),
        params["wr"], params["br"].reshape(L, 1, H),
        row(params["lnf_g"]), row(params["lnf_b"]),
        params["wf"], row(params["bf"]),
    ]

    def full_spec(a):
        nd = a.ndim
        return pl.BlockSpec(a.shape, lambda i: (0,) * nd)   # constant block -> loaded once

    in_specs = (
        [pl.BlockSpec((tb, 1), lambda i: (i, 0)),
         pl.BlockSpec((tb, din), lambda i: (i, 0))]
        + [full_spec(a) for a in weight_inputs]
    )

    kernel = functools.partial(_denoiser_kernel, num_layers=L, eps=1e-5)
    # TODO(synk): for the full-size config (hidden_dim=1024, num_layers=6) the stacked residual
    # weights (~24 MiB, double-buffered) exceed v7x's 64 MiB VMEM; tile the layer loop over an
    # extra "arbitrary" grid axis (or emit_pipeline over HBM-resident weights) instead of
    # keeping every layer resident as done here for the small test config.
    y = pl.pallas_call(
        kernel,
        out_shape=jax.ShapeDtypeStruct((b_pad, dout), jnp.float32),
        grid=grid,
        in_specs=in_specs,
        out_specs=pl.BlockSpec((tb, dout), lambda i: (i, 0)),
        compiler_params=pltpu.CompilerParams(
            dimension_semantics=("parallel",),
        ),
    )(t, x, *weight_inputs)
    return y[:b].reshape(b, hor, d)


# ----------------------------- pure-JAX reference + param init -----------------------------
def _reference_forward(traj, act, timesteps, p, eps=1e-5):
    hp = jax.lax.Precision.HIGHEST
    b, hor, d = traj.shape
    x = jnp.concatenate([traj, act], axis=-1).reshape(b, -1).astype(jnp.float32)
    t = timesteps.astype(jnp.float32)
    freqs = t[:, None] * p["fourier_w"][None, :] * (2.0 * math.pi)
    four = jnp.concatenate([t[:, None], jnp.sin(freqs), jnp.cos(freqs)], axis=-1)
    h1 = jnp.dot(four, p["wt1"], precision=hp) + p["bt1"]
    h1 = h1 * jax.nn.sigmoid(h1)
    te = jnp.dot(h1, p["wt2"], precision=hp) + p["bt2"]
    z = jnp.dot(x, p["wp"], precision=hp) + p["bp"] + te

    def ln(v, g, b_):
        mu = jnp.mean(v, -1, keepdims=True)
        var = jnp.mean(jnp.square(v - mu), -1, keepdims=True)
        return (v - mu) * jax.lax.rsqrt(var + eps) * g + b_

    h = jnp.dot(z, p["w0"], precision=hp) + p["b0"]
    for i in range(p["wr"].shape[0]):
        a = jnp.maximum(ln(h, p["ln_g"][i], p["ln_b"][i]), 0.0)
        h = h + jnp.dot(a, p["wr"][i], precision=hp) + p["br"][i]
    a = jnp.maximum(ln(h, p["lnf_g"], p["lnf_b"]), 0.0)
    y = jnp.dot(a, p["wf"], precision=hp) + p["bf"]
    return y.reshape(b, hor, d)


def _init_params(key, *, d_in_total, embed_dim, hidden_dim, num_layers, out_dim, half_dim):
    ks = jax.random.split(key, 17)

    def dense(k, fin, fout):
        return jax.random.normal(k, (fin, fout), jnp.float32) / math.sqrt(fin)

    fdim = 2 * half_dim + 1
    p = {
        "fourier_w": jax.random.normal(ks[0], (half_dim,), jnp.float32),
        "wt1": dense(ks[1], fdim, embed_dim),
        "bt1": 0.1 * jax.random.normal(ks[2], (embed_dim,), jnp.float32),
        "wt2": dense(ks[3], embed_dim, embed_dim),
        "bt2": 0.1 * jax.random.normal(ks[4], (embed_dim,), jnp.float32),
        "wp": dense(ks[5], d_in_total, embed_dim),
        "bp": 0.1 * jax.random.normal(ks[6], (embed_dim,), jnp.float32),
        "w0": dense(ks[7], embed_dim, hidden_dim),
        "b0": 0.1 * jax.random.normal(ks[8], (hidden_dim,), jnp.float32),
        "ln_g": 1.0 + 0.1 * jax.random.normal(ks[9], (num_layers, hidden_dim), jnp.float32),
        "ln_b": 0.1 * jax.random.normal(ks[10], (num_layers, hidden_dim), jnp.float32),
        "wr": jax.random.normal(ks[11], (num_layers, hidden_dim, hidden_dim),
                                jnp.float32) / math.sqrt(hidden_dim),
        "br": 0.1 * jax.random.normal(ks[12], (num_layers, hidden_dim), jnp.float32),
        "lnf_g": 1.0 + 0.1 * jax.random.normal(ks[13], (hidden_dim,), jnp.float32),
        "lnf_b": 0.1 * jax.random.normal(ks[14], (hidden_dim,), jnp.float32),
        "wf": dense(ks[15], hidden_dim, out_dim),
        "bf": 0.1 * jax.random.normal(ks[16], (out_dim,), jnp.float32),
    }
    return p


if __name__ == "__main__":
    # Small config consistent with ResidualMLPDenoiser defaults (scaled down).
    B, HOR, TRANS, COND = 8, 4, 8, 4          # batch, horizon, transition_dim, cond_dim
    HIDDEN, LAYERS, SINU_DIM = 256, 3, 16     # hidden_dim, num_layers, learned_sinusoidal_dim
    d_in = HOR * TRANS
    cond_total = HOR * COND
    out_dim = HOR * TRANS
    embed_dim = max(d_in + cond_total, 128)   # embed_dim = max(d_in + cond_dim, 128)
    half = SINU_DIM // 2

    key = jax.random.PRNGKey(0)
    k_traj, k_act, k_t, k_p = jax.random.split(key, 4)
    traj = jax.random.normal(k_traj, (B, HOR, TRANS), jnp.float32)
    act = jax.random.normal(k_act, (B, HOR, COND), jnp.float32)
    timesteps = jax.random.uniform(k_t, (B,), jnp.float32, minval=0.0, maxval=1.0)

    params = _init_params(k_p, d_in_total=d_in + cond_total, embed_dim=embed_dim,
                          hidden_dim=HIDDEN, num_layers=LAYERS, out_dim=out_dim,
                          half_dim=half)

    y = residual_mlp_denoiser_forward(traj, act, timesteps, params)
    y = jax.block_until_ready(y)
    ref = jax.block_until_ready(_reference_forward(traj, act, timesteps, params))

    assert y.shape == (B, HOR, TRANS) and y.dtype == jnp.float32
    err = float(jnp.max(jnp.abs(y - ref)))
    assert jnp.allclose(y, ref, atol=1e-3, rtol=1e-3), f"mismatch vs reference: max abs err {err}"
    print("KERNEL_OK")
</pallas_src>

<mosaic_0001>
module attributes {stable_mosaic.version = 11 : i64} {
  func.func @_denoiser_kernel(%arg0: i32, %arg1: memref<8x1xf32, #tpu.memory_space<vmem>>, %arg2: memref<8x48xf32, #tpu.memory_space<vmem>>, %arg3: memref<1x8xf32, #tpu.memory_space<vmem>>, %arg4: memref<1x128xf32, #tpu.memory_space<vmem>>, %arg5: memref<8x128xf32, #tpu.memory_space<vmem>>, %arg6: memref<8x128xf32, #tpu.memory_space<vmem>>, %arg7: memref<1x128xf32, #tpu.memory_space<vmem>>, %arg8: memref<128x128xf32, #tpu.memory_space<vmem>>, %arg9: memref<1x128xf32, #tpu.memory_space<vmem>>, %arg10: memref<48x128xf32, #tpu.memory_space<vmem>>, %arg11: memref<1x128xf32, #tpu.memory_space<vmem>>, %arg12: memref<128x256xf32, #tpu.memory_space<vmem>>, %arg13: memref<1x256xf32, #tpu.memory_space<vmem>>, %arg14: memref<3x1x256xf32, #tpu.memory_space<vmem>>, %arg15: memref<3x1x256xf32, #tpu.memory_space<vmem>>, %arg16: memref<3x256x256xf32, #tpu.memory_space<vmem>>, %arg17: memref<3x1x256xf32, #tpu.memory_space<vmem>>, %arg18: memref<1x256xf32, #tpu.memory_space<vmem>>, %arg19: memref<1x256xf32, #tpu.memory_space<vmem>>, %arg20: memref<256x32xf32, #tpu.memory_space<vmem>>, %arg21: memref<1x32xf32, #tpu.memory_space<vmem>>, %arg22: memref<8x32xf32, #tpu.memory_space<vmem>>) attributes {dimension_semantics = [#tpu.dimension_semantics<parallel>], iteration_bounds = array<i64: 1>, scalar_prefetch = 0 : i64, scratch_operands = 0 : i64, tpu.core_type = #tpu.core_type<tc>, window_params = [{transform_indices = @transform_0, window_bounds = array<i64: 8, 1>}, {transform_indices = @transform_1, window_bounds = array<i64: 8, 48>}, {pipeline_mode = #tpu.pipeline_mode<synchronous>, transform_indices = @transform_2, window_bounds = array<i64: 1, 8>}, {pipeline_mode = #tpu.pipeline_mode<synchronous>, transform_indices = @transform_3, window_bounds = array<i64: 1, 128>}, {pipeline_mode = #tpu.pipeline_mode<synchronous>, transform_indices = @transform_4, window_bounds = array<i64: 8, 128>}, {pipeline_mode = #tpu.pipeline_mode<synchronous>, transform_indices = @transform_5, window_bounds = array<i64: 8, 128>}, {pipeline_mode = #tpu.pipeline_mode<synchronous>, transform_indices = @transform_6, window_bounds = array<i64: 1, 128>}, {pipeline_mode = #tpu.pipeline_mode<synchronous>, transform_indices = @transform_7, window_bounds = array<i64: 128, 128>}, {pipeline_mode = #tpu.pipeline_mode<synchronous>, transform_indices = @transform_8, window_bounds = array<i64: 1, 128>}, {pipeline_mode = #tpu.pipeline_mode<synchronous>, transform_indices = @transform_9, window_bounds = array<i64: 48, 128>}, {pipeline_mode = #tpu.pipeline_mode<synchronous>, transform_indices = @transform_10, window_bounds = array<i64: 1, 128>}, {pipeline_mode = #tpu.pipeline_mode<synchronous>, transform_indices = @transform_11, window_bounds = array<i64: 128, 256>}, {pipeline_mode = #tpu.pipeline_mode<synchronous>, transform_indices = @transform_12, window_bounds = array<i64: 1, 256>}, {pipeline_mode = #tpu.pipeline_mode<synchronous>, transform_indices = @transform_13, window_bounds = array<i64: 3, 1, 256>}, {pipeline_mode = #tpu.pipeline_mode<synchronous>, transform_indices = @transform_14, window_bounds = array<i64: 3, 1, 256>}, {pipeline_mode = #tpu.pipeline_mode<synchronous>, transform_indices = @transform_15, window_bounds = array<i64: 3, 256, 256>}, {pipeline_mode = #tpu.pipeline_mode<synchronous>, transform_indices = @transform_16, window_bounds = array<i64: 3, 1, 256>}, {pipeline_mode = #tpu.pipeline_mode<synchronous>, transform_indices = @transform_17, window_bounds = array<i64: 1, 256>}, {pipeline_mode = #tpu.pipeline_mode<synchronous>, transform_indices = @transform_18, window_bounds = array<i64: 1, 256>}, {pipeline_mode = #tpu.pipeline_mode<synchronous>, transform_indices = @transform_19, window_bounds = array<i64: 256, 32>}, {pipeline_mode = #tpu.pipeline_mode<synchronous>, transform_indices = @transform_20, window_bounds = array<i64: 1, 32>}, {transform_indices = @transform_21, window_bounds = array<i64: 8, 32>}]} {
    %c0 = arith.constant 0 : index
    %c0_0 = arith.constant 0 : index
    %0 = vector.load %arg1[%c0, %c0_0] : memref<8x1xf32, #tpu.memory_space<vmem>>, vector<8x1xf32>
    %c0_1 = arith.constant 0 : index
    %c0_2 = arith.constant 0 : index
    %1 = vector.load %arg3[%c0_1, %c0_2] : memref<1x8xf32, #tpu.memory_space<vmem>>, vector<1x8xf32>
    %2 = vector.broadcast %0 : vector<8x1xf32> to vector<8x8xf32>
    %3 = vector.broadcast %1 : vector<1x8xf32> to vector<8x8xf32>
    %4 = arith.mulf %2, %3 : vector<8x8xf32>
    %cst = arith.constant 6.28318548 : f32
    %5 = vector.broadcast %cst : f32 to vector<8x8xf32>
    %6 = arith.mulf %4, %5 : vector<8x8xf32>
    %7 = math.sin %6 : vector<8x8xf32>
    %8 = math.cos %6 : vector<8x8xf32>
    %c0_3 = arith.constant 0 : index
    %c0_4 = arith.constant 0 : index
    %9 = vector.load %arg4[%c0_3, %c0_4] : memref<1x128xf32, #tpu.memory_space<vmem>>, vector<1x128xf32>
    %10 = vector.broadcast %0 : vector<8x1xf32> to vector<8x128xf32>
    %11 = vector.broadcast %9 : vector<1x128xf32> to vector<8x128xf32>
    %12 = arith.mulf %10, %11 : vector<8x128xf32>
    %c0_5 = arith.constant 0 : index
    %c0_6 = arith.constant 0 : index
    %13 = vector.load %arg5[%c0_5, %c0_6] : memref<8x128xf32, #tpu.memory_space<vmem>>, vector<8x128xf32>
    %cst_7 = arith.constant dense<0.000000e+00> : vector<8x128xf32>
    %14 = tpu.matmul %7, %13, %cst_7 {dimension_numbers = #tpu.dot_dimension_numbers<[1], [0], [0], [1], [0, 0, 1, 1], [], []>} : vector<8x8xf32>, vector<8x128xf32>, vector<8x128xf32> -> vector<8x128xf32>
    %15 = arith.addf %12, %14 : vector<8x128xf32>
    %c0_8 = arith.constant 0 : index
    %c0_9 = arith.constant 0 : index
    %16 = vector.load %arg6[%c0_8, %c0_9] : memref<8x128xf32, #tpu.memory_space<vmem>>, vector<8x128xf32>
    %cst_10 = arith.constant dense<0.000000e+00> : vector<8x128xf32>
    %17 = tpu.matmul %8, %16, %cst_10 {dimension_numbers = #tpu.dot_dimension_numbers<[1], [0], [0], [1], [0, 0, 1, 1], [], []>} : vector<8x8xf32>, vector<8x128xf32>, vector<8x128xf32> -> vector<8x128xf32>
    %18 = arith.addf %15, %17 : vector<8x128xf32>
    %c0_11 = arith.constant 0 : index
    %c0_12 = arith.constant 0 : index
    %19 = vector.load %arg7[%c0_11, %c0_12] : memref<1x128xf32, #tpu.memory_space<vmem>>, vector<1x128xf32>
    %20 = vector.broadcast %19 : vector<1x128xf32> to vector<8x128xf32>
    %21 = arith.addf %18, %20 : vector<8x128xf32>
    %cst_13 = arith.constant 0.000000e+00 : f32
    %22 = vector.broadcast %cst_13 : f32 to vector<8x128xf32>
    %23 = arith.subf %22, %21 : vector<8x128xf32>
    %24 = math.exp %23 : vector<8x128xf32>
    %cst_14 = arith.constant 1.000000e+00 : f32
    %25 = vector.broadcast %cst_14 : f32 to vector<8x128xf32>
    %26 = arith.addf %25, %24 : vector<8x128xf32>
    %cst_15 = arith.constant 1.000000e+00 : f32
    %27 = vector.broadcast %cst_15 : f32 to vector<8x128xf32>
    %28 = arith.divf %27, %26 : vector<8x128xf32>
    %29 = arith.mulf %21, %28 : vector<8x128xf32>
    %c0_16 = arith.constant 0 : index
    %c0_17 = arith.constant 0 : index
    %30 = vector.load %arg8[%c0_16, %c0_17] : memref<128x128xf32, #tpu.memory_space<vmem>>, vector<128x128xf32>
    %cst_18 = arith.constant dense<0.000000e+00> : vector<8x128xf32>
    %31 = tpu.matmul %29, %30, %cst_18 {dimension_numbers = #tpu.dot_dimension_numbers<[1], [0], [0], [1], [0, 0, 1, 1], [], []>} : vector<8x128xf32>, vector<128x128xf32>, vector<8x128xf32> -> vector<8x128xf32>
    %c0_19 = arith.constant 0 : index
    %c0_20 = arith.constant 0 : index
    %32 = vector.load %arg9[%c0_19, %c0_20] : memref<1x128xf32, #tpu.memory_space<vmem>>, vector<1x128xf32>
    %33 = vector.broadcast %32 : vector<1x128xf32> to vector<8x128xf32>
    %34 = arith.addf %31, %33 : vector<8x128xf32>
    %c0_21 = arith.constant 0 : index
    %c0_22 = arith.constant 0 : index
    %35 = vector.load %arg2[%c0_21, %c0_22] : memref<8x48xf32, #tpu.memory_space<vmem>>, vector<8x48xf32>
    %c0_23 = arith.constant 0 : index
    %c0_24 = arith.constant 0 : index
    %36 = vector.load %arg10[%c0_23, %c0_24] : memref<48x128xf32, #tpu.memory_space<vmem>>, vector<48x128xf32>
    %cst_25 = arith.constant dense<0.000000e+00> : vector<8x128xf32>
    %37 = tpu.matmul %35, %36, %cst_25 {dimension_numbers = #tpu.dot_dimension_numbers<[1], [0], [0], [1], [0, 0, 1, 1], [], []>} : vector<8x48xf32>, vector<48x128xf32>, vector<8x128xf32> -> vector<8x128xf32>
    %c0_26 = arith.constant 0 : index
    %c0_27 = arith.constant 0 : index
    %38 = vector.load %arg11[%c0_26, %c0_27] : memref<1x128xf32, #tpu.memory_space<vmem>>, vector<1x128xf32>
    %39 = vector.broadcast %38 : vector<1x128xf32> to vector<8x128xf32>
    %40 = arith.addf %37, %39 : vector<8x128xf32>
    %41 = arith.addf %40, %34 : vector<8x128xf32>
    %c0_28 = arith.constant 0 : index
    %c0_29 = arith.constant 0 : index
    %42 = vector.load %arg12[%c0_28, %c0_29] : memref<128x256xf32, #tpu.memory_space<vmem>>, vector<128x256xf32>
    %cst_30 = arith.constant dense<0.000000e+00> : vector<8x256xf32>
    %43 = tpu.matmul %41, %42, %cst_30 {dimension_numbers = #tpu.dot_dimension_numbers<[1], [0], [0], [1], [0, 0, 1, 1], [], []>} : vector<8x128xf32>, vector<128x256xf32>, vector<8x256xf32> -> vector<8x256xf32>
    %c0_31 = arith.constant 0 : index
    %c0_32 = arith.constant 0 : index
    %44 = vector.load %arg13[%c0_31, %c0_32] : memref<1x256xf32, #tpu.memory_space<vmem>>, vector<1x256xf32>
    %45 = vector.broadcast %44 : vector<1x256xf32> to vector<8x256xf32>
    %46 = arith.addf %43, %45 : vector<8x256xf32>
    %c0_33 = arith.constant 0 : index
    %c0_34 = arith.constant 0 : index
    %c0_35 = arith.constant 0 : index
    %47 = vector.load %arg14[%c0_33, %c0_34, %c0_35] : memref<3x1x256xf32, #tpu.memory_space<vmem>>, vector<1x1x256xf32>
    %48 = vector.shape_cast %47 : vector<1x1x256xf32> to vector<1x256xf32>
    %c0_36 = arith.constant 0 : index
    %c0_37 = arith.constant 0 : index
    %c0_38 = arith.constant 0 : index
    %49 = vector.load %arg15[%c0_36, %c0_37, %c0_38] : memref<3x1x256xf32, #tpu.memory_space<vmem>>, vector<1x1x256xf32>
    %50 = vector.shape_cast %49 : vector<1x1x256xf32> to vector<1x256xf32>
    %cst_39 = arith.constant dense<0.000000e+00> : vector<8xf32>
    %51 = vector.multi_reduction <add>, %46, %cst_39 [1] : vector<8x256xf32> to vector<8xf32>
    %52 = vector.shape_cast %51 : vector<8xf32> to vector<8x1xf32>
    %cst_40 = arith.constant 2.560000e+02 : f32
    %53 = vector.broadcast %cst_40 : f32 to vector<8x1xf32>
    %54 = arith.divf %52, %53 : vector<8x1xf32>
    %55 = vector.broadcast %54 : vector<8x1xf32> to vector<8x256xf32>
    %56 = arith.subf %46, %55 : vector<8x256xf32>
    %57 = arith.mulf %56, %56 : vector<8x256xf32>
    %cst_41 = arith.constant dense<0.000000e+00> : vector<8xf32>
    %58 = vector.multi_reduction <add>, %57, %cst_41 [1] : vector<8x256xf32> to vector<8xf32>
    %59 = vector.shape_cast %58 : vector<8xf32> to vector<8x1xf32>
    %cst_42 = arith.constant 2.560000e+02 : f32
    %60 = vector.broadcast %cst_42 : f32 to vector<8x1xf32>
    %61 = arith.divf %59, %60 : vector<8x1xf32>
    %62 = vector.broadcast %54 : vector<8x1xf32> to vector<8x256xf32>
    %63 = arith.subf %46, %62 : vector<8x256xf32>
    %cst_43 = arith.constant 9.99999974E-6 : f32
    %64 = vector.broadcast %cst_43 : f32 to vector<8x1xf32>
    %65 = arith.addf %61, %64 : vector<8x1xf32>
    %66 = math.rsqrt %65 : vector<8x1xf32>
    %67 = vector.broadcast %66 : vector<8x1xf32> to vector<8x256xf32>
    %68 = arith.mulf %63, %67 : vector<8x256xf32>
    %69 = vector.broadcast %48 : vector<1x256xf32> to vector<8x256xf32>
    %70 = arith.mulf %68, %69 : vector<8x256xf32>
    %71 = vector.broadcast %50 : vector<1x256xf32> to vector<8x256xf32>
    %72 = arith.addf %70, %71 : vector<8x256xf32>
    %cst_44 = arith.constant 0.000000e+00 : f32
    %73 = vector.broadcast %cst_44 : f32 to vector<8x256xf32>
    %74 = arith.maximumf %72, %73 : vector<8x256xf32>
    %c0_45 = arith.constant 0 : index
    %c0_46 = arith.constant 0 : index
    %c0_47 = arith.constant 0 : index
    %75 = vector.load %arg16[%c0_45, %c0_46, %c0_47] : memref<3x256x256xf32, #tpu.memory_space<vmem>>, vector<1x256x256xf32>
    %76 = vector.shape_cast %75 : vector<1x256x256xf32> to vector<256x256xf32>
    %cst_48 = arith.constant dense<0.000000e+00> : vector<8x256xf32>
    %77 = tpu.matmul %74, %76, %cst_48 {dimension_numbers = #tpu.dot_dimension_numbers<[1], [0], [0], [1], [0, 0, 1, 1], [], []>} : vector<8x256xf32>, vector<256x256xf32>, vector<8x256xf32> -> vector<8x256xf32>
    %78 = arith.addf %46, %77 : vector<8x256xf32>
    %c0_49 = arith.constant 0 : index
    %c0_50 = arith.constant 0 : index
    %c0_51 = arith.constant 0 : index
    %79 = vector.load %arg17[%c0_49, %c0_50, %c0_51] : memref<3x1x256xf32, #tpu.memory_space<vmem>>, vector<1x1x256xf32>
    %80 = vector.shape_cast %79 : vector<1x1x256xf32> to vector<1x256xf32>
    %81 = vector.broadcast %80 : vector<1x256xf32> to vector<8x256xf32>
    %82 = arith.addf %78, %81 : vector<8x256xf32>
    %c1 = arith.constant 1 : index
    %c0_52 = arith.constant 0 : index
    %c0_53 = arith.constant 0 : index
    %83 = vector.load %arg14[%c1, %c0_52, %c0_53] : memref<3x1x256xf32, #tpu.memory_space<vmem>>, vector<1x1x256xf32>
    %84 = vector.shape_cast %83 : vector<1x1x256xf32> to vector<1x256xf32>
    %c1_54 = arith.constant 1 : index
    %c0_55 = arith.constant 0 : index
    %c0_56 = arith.constant 0 : index
    %85 = vector.load %arg15[%c1_54, %c0_55, %c0_56] : memref<3x1x256xf32, #tpu.memory_space<vmem>>, vector<1x1x256xf32>
    %86 = vector.shape_cast %85 : vector<1x1x256xf32> to vector<1x256xf32>
    %cst_57 = arith.constant dense<0.000000e+00> : vector<8xf32>
    %87 = vector.multi_reduction <add>, %82, %cst_57 [1] : vector<8x256xf32> to vector<8xf32>
    %88 = vector.shape_cast %87 : vector<8xf32> to vector<8x1xf32>
    %cst_58 = arith.constant 2.560000e+02 : f32
    %89 = vector.broadcast %cst_58 : f32 to vector<8x1xf32>
    %90 = arith.divf %88, %89 : vector<8x1xf32>
    %91 = vector.broadcast %90 : vector<8x1xf32> to vector<8x256xf32>
    %92 = arith.subf %82, %91 : vector<8x256xf32>
    %93 = arith.mulf %92, %92 : vector<8x256xf32>
    %cst_59 = arith.constant dense<0.000000e+00> : vector<8xf32>
    %94 = vector.multi_reduction <add>, %93, %cst_59 [1] : vector<8x256xf32> to vector<8xf32>
    %95 = vector.shape_cast %94 : vector<8xf32> to vector<8x1xf32>
    %cst_60 = arith.constant 2.560000e+02 : f32
    %96 = vector.broadcast %cst_60 : f32 to vector<8x1xf32>
    %97 = arith.divf %95, %96 : vector<8x1xf32>
    %98 = vector.broadcast %90 : vector<8x1xf32> to vector<8x256xf32>
    %99 = arith.subf %82, %98 : vector<8x256xf32>
    %cst_61 = arith.constant 9.99999974E-6 : f32
    %100 = vector.broadcast %cst_61 : f32 to vector<8x1xf32>
    %101 = arith.addf %97, %100 : vector<8x1xf32>
    %102 = math.rsqrt %101 : vector<8x1xf32>
    %103 = vector.broadcast %102 : vector<8x1xf32> to vector<8x256xf32>
    %104 = arith.mulf %99, %103 : vector<8x256xf32>
    %105 = vector.broadcast %84 : vector<1x256xf32> to vector<8x256xf32>
    %106 = arith.mulf %104, %105 : vector<8x256xf32>
    %107 = vector.broadcast %86 : vector<1x256xf32> to vector<8x256xf32>
    %108 = arith.addf %106, %107 : vector<8x256xf32>
    %cst_62 = arith.constant 0.000000e+00 : f32
    %109 = vector.broadcast %cst_62 : f32 to vector<8x256xf32>
    %110 = arith.maximumf %108, %109 : vector<8x256xf32>
    %c1_63 = arith.constant 1 : index
    %c0_64 = arith.constant 0 : index
    %c0_65 = arith.constant 0 : index
    %111 = vector.load %arg16[%c1_63, %c0_64, %c0_65] : memref<3x256x256xf32, #tpu.memory_space<vmem>>, vector<1x256x256xf32>
    %112 = vector.shape_cast %111 : vector<1x256x256xf32> to vector<256x256xf32>
    %cst_66 = arith.constant dense<0.000000e+00> : vector<8x256xf32>
    %113 = tpu.matmul %110, %112, %cst_66 {dimension_numbers = #tpu.dot_dimension_numbers<[1], [0], [0], [1], [0, 0, 1, 1], [], []>} : vector<8x256xf32>, vector<256x256xf32>, vector<8x256xf32> -> vector<8x256xf32>
    %114 = arith.addf %82, %113 : vector<8x256xf32>
    %c1_67 = arith.constant 1 : index
    %c0_68 = arith.constant 0 : index
    %c0_69 = arith.constant 0 : index
    %115 = vector.load %arg17[%c1_67, %c0_68, %c0_69] : memref<3x1x256xf32, #tpu.memory_space<vmem>>, vector<1x1x256xf32>
    %116 = vector.shape_cast %115 : vector<1x1x256xf32> to vector<1x256xf32>
    %117 = vector.broadcast %116 : vector<1x256xf32> to vector<8x256xf32>
    %118 = arith.addf %114, %117 : vector<8x256xf32>
    %c2 = arith.constant 2 : index
    %c0_70 = arith.constant 0 : index
    %c0_71 = arith.constant 0 : index
    %119 = vector.load %arg14[%c2, %c0_70, %c0_71] : memref<3x1x256xf32, #tpu.memory_space<vmem>>, vector<1x1x256xf32>
    %120 = vector.shape_cast %119 : vector<1x1x256xf32> to vector<1x256xf32>
    %c2_72 = arith.constant 2 : index
    %c0_73 = arith.constant 0 : index
    %c0_74 = arith.constant 0 : index
    %121 = vector.load %arg15[%c2_72, %c0_73, %c0_74] : memref<3x1x256xf32, #tpu.memory_space<vmem>>, vector<1x1x256xf32>
    %122 = vector.shape_cast %121 : vector<1x1x256xf32> to vector<1x256xf32>
    %cst_75 = arith.constant dense<0.000000e+00> : vector<8xf32>
    %123 = vector.multi_reduction <add>, %118, %cst_75 [1] : vector<8x256xf32> to vector<8xf32>
    %124 = vector.shape_cast %123 : vector<8xf32> to vector<8x1xf32>
    %cst_76 = arith.constant 2.560000e+02 : f32
    %125 = vector.broadcast %cst_76 : f32 to vector<8x1xf32>
    %126 = arith.divf %124, %125 : vector<8x1xf32>
    %127 = vector.broadcast %126 : vector<8x1xf32> to vector<8x256xf32>
    %128 = arith.subf %118, %127 : vector<8x256xf32>
    %129 = arith.mulf %128, %128 : vector<8x256xf32>
    %cst_77 = arith.constant dense<0.000000e+00> : vector<8xf32>
    %130 = vector.multi_reduction <add>, %129, %cst_77 [1] : vector<8x256xf32> to vector<8xf32>
    %131 = vector.shape_cast %130 : vector<8xf32> to vector<8x1xf32>
    %cst_78 = arith.constant 2.560000e+02 : f32
    %132 = vector.broadcast %cst_78 : f32 to vector<8x1xf32>
    %133 = arith.divf %131, %132 : vector<8x1xf32>
    %134 = vector.broadcast %126 : vector<8x1xf32> to vector<8x256xf32>
    %135 = arith.subf %118, %134 : vector<8x256xf32>
    %cst_79 = arith.constant 9.99999974E-6 : f32
    %136 = vector.broadcast %cst_79 : f32 to vector<8x1xf32>
    %137 = arith.addf %133, %136 : vector<8x1xf32>
    %138 = math.rsqrt %137 : vector<8x1xf32>
    %139 = vector.broadcast %138 : vector<8x1xf32> to vector<8x256xf32>
    %140 = arith.mulf %135, %139 : vector<8x256xf32>
    %141 = vector.broadcast %120 : vector<1x256xf32> to vector<8x256xf32>
    %142 = arith.mulf %140, %141 : vector<8x256xf32>
    %143 = vector.broadcast %122 : vector<1x256xf32> to vector<8x256xf32>
    %144 = arith.addf %142, %143 : vector<8x256xf32>
    %cst_80 = arith.constant 0.000000e+00 : f32
    %145 = vector.broadcast %cst_80 : f32 to vector<8x256xf32>
    %146 = arith.maximumf %144, %145 : vector<8x256xf32>
    %c2_81 = arith.constant 2 : index
    %c0_82 = arith.constant 0 : index
    %c0_83 = arith.constant 0 : index
    %147 = vector.load %arg16[%c2_81, %c0_82, %c0_83] : memref<3x256x256xf32, #tpu.memory_space<vmem>>, vector<1x256x256xf32>
    %148 = vector.shape_cast %147 : vector<1x256x256xf32> to vector<256x256xf32>
    %cst_84 = arith.constant dense<0.000000e+00> : vector<8x256xf32>
    %149 = tpu.matmul %146, %148, %cst_84 {dimension_numbers = #tpu.dot_dimension_numbers<[1], [0], [0], [1], [0, 0, 1, 1], [], []>} : vector<8x256xf32>, vector<256x256xf32>, vector<8x256xf32> -> vector<8x256xf32>
    %150 = arith.addf %118, %149 : vector<8x256xf32>
    %c2_85 = arith.constant 2 : index
    %c0_86 = arith.constant 0 : index
    %c0_87 = arith.constant 0 : index
    %151 = vector.load %arg17[%c2_85, %c0_86, %c0_87] : memref<3x1x256xf32, #tpu.memory_space<vmem>>, vector<1x1x256xf32>
    %152 = vector.shape_cast %151 : vector<1x1x256xf32> to vector<1x256xf32>
    %153 = vector.broadcast %152 : vector<1x256xf32> to vector<8x256xf32>
    %154 = arith.addf %150, %153 : vector<8x256xf32>
    %c0_88 = arith.constant 0 : index
    %c0_89 = arith.constant 0 : index
    %155 = vector.load %arg18[%c0_88, %c0_89] : memref<1x256xf32, #tpu.memory_space<vmem>>, vector<1x256xf32>
    %c0_90 = arith.constant 0 : index
    %c0_91 = arith.constant 0 : index
    %156 = vector.load %arg19[%c0_90, %c0_91] : memref<1x256xf32, #tpu.memory_space<vmem>>, vector<1x256xf32>
    %cst_92 = arith.constant dense<0.000000e+00> : vector<8xf32>
    %157 = vector.multi_reduction <add>, %154, %cst_92 [1] : vector<8x256xf32> to vector<8xf32>
    %158 = vector.shape_cast %157 : vector<8xf32> to vector<8x1xf32>
    %cst_93 = arith.constant 2.560000e+02 : f32
    %159 = vector.broadcast %cst_93 : f32 to vector<8x1xf32>
    %160 = arith.divf %158, %159 : vector<8x1xf32>
    %161 = vector.broadcast %160 : vector<8x1xf32> to vector<8x256xf32>
    %162 = arith.subf %154, %161 : vector<8x256xf32>
    %163 = arith.mulf %162, %162 : vector<8x256xf32>
    %cst_94 = arith.constant dense<0.000000e+00> : vector<8xf32>
    %164 = vector.multi_reduction <add>, %163, %cst_94 [1] : vector<8x256xf32> to vector<8xf32>
    %165 = vector.shape_cast %164 : vector<8xf32> to vector<8x1xf32>
    %cst_95 = arith.constant 2.560000e+02 : f32
    %166 = vector.broadcast %cst_95 : f32 to vector<8x1xf32>
    %167 = arith.divf %165, %166 : vector<8x1xf32>
    %168 = vector.broadcast %160 : vector<8x1xf32> to vector<8x256xf32>
    %169 = arith.subf %154, %168 : vector<8x256xf32>
    %cst_96 = arith.constant 9.99999974E-6 : f32
    %170 = vector.broadcast %cst_96 : f32 to vector<8x1xf32>
    %171 = arith.addf %167, %170 : vector<8x1xf32>
    %172 = math.rsqrt %171 : vector<8x1xf32>
    %173 = vector.broadcast %172 : vector<8x1xf32> to vector<8x256xf32>
    %174 = arith.mulf %169, %173 : vector<8x256xf32>
    %175 = vector.broadcast %155 : vector<1x256xf32> to vector<8x256xf32>
    %176 = arith.mulf %174, %175 : vector<8x256xf32>
    %177 = vector.broadcast %156 : vector<1x256xf32> to vector<8x256xf32>
    %178 = arith.addf %176, %177 : vector<8x256xf32>
    %cst_97 = arith.constant 0.000000e+00 : f32
    %179 = vector.broadcast %cst_97 : f32 to vector<8x256xf32>
    %180 = arith.maximumf %178, %179 : vector<8x256xf32>
    %c0_98 = arith.constant 0 : index
    %c0_99 = arith.constant 0 : index
    %181 = vector.load %arg20[%c0_98, %c0_99] : memref<256x32xf32, #tpu.memory_space<vmem>>, vector<256x32xf32>
    %cst_100 = arith.constant dense<0.000000e+00> : vector<8x32xf32>
    %182 = tpu.matmul %180, %181, %cst_100 {dimension_numbers = #tpu.dot_dimension_numbers<[1], [0], [0], [1], [0, 0, 1, 1], [], []>} : vector<8x256xf32>, vector<256x32xf32>, vector<8x32xf32> -> vector<8x32xf32>
    %c0_101 = arith.constant 0 : index
    %c0_102 = arith.constant 0 : index
    %183 = vector.load %arg21[%c0_101, %c0_102] : memref<1x32xf32, #tpu.memory_space<vmem>>, vector<1x32xf32>
    %184 = vector.broadcast %183 : vector<1x32xf32> to vector<8x32xf32>
    %185 = arith.addf %182, %184 : vector<8x32xf32>
    %c0_103 = arith.constant 0 : index
    %c0_104 = arith.constant 0 : index
    %186 = vector.load %arg22[%c0_103, %c0_104] : memref<8x32xf32, #tpu.memory_space<vmem>>, vector<8x32xf32>
    tpu.vector_store %arg22[%c0_103, %c0_104], %185 {strides = array<i32>} : memref<8x32xf32, #tpu.memory_space<vmem>>, vector<8x32xf32>,
    return
  }
  func.func @transform_0(%arg0: i32) -> (i32, i32) {
    %c0_i32 = arith.constant 0 : i32
    %c0_i32_0 = arith.constant 0 : i32
    return %arg0, %c0_i32 : i32, i32
  }
  func.func @transform_1(%arg0: i32) -> (i32, i32) {
    %c0_i32 = arith.constant 0 : i32
    %c0_i32_0 = arith.constant 0 : i32
    return %arg0, %c0_i32 : i32, i32
  }
  func.func @transform_2(%arg0: i32) -> (i32, i32) {
    %c0_i32 = arith.constant 0 : i32
    %c0_i32_0 = arith.constant 0 : i32
    %c0_i32_1 = arith.constant 0 : i32
    return %c0_i32, %c0_i32_0 : i32, i32
  }
  func.func @transform_3(%arg0: i32) -> (i32, i32) {
    %c0_i32 = arith.constant 0 : i32
    %c0_i32_0 = arith.constant 0 : i32
    %c0_i32_1 = arith.constant 0 : i32
    return %c0_i32, %c0_i32_0 : i32, i32
  }
  func.func @transform_4(%arg0: i32) -> (i32, i32) {
    %c0_i32 = arith.constant 0 : i32
    %c0_i32_0 = arith.constant 0 : i32
    %c0_i32_1 = arith.constant 0 : i32
    return %c0_i32, %c0_i32_0 : i32, i32
  }
  func.func @transform_5(%arg0: i32) -> (i32, i32) {
    %c0_i32 = arith.constant 0 : i32
    %c0_i32_0 = arith.constant 0 : i32
    %c0_i32_1 = arith.constant 0 : i32
    return %c0_i32, %c0_i32_0 : i32, i32
  }
  func.func @transform_6(%arg0: i32) -> (i32, i32) {
    %c0_i32 = arith.constant 0 : i32
    %c0_i32_0 = arith.constant 0 : i32
    %c0_i32_1 = arith.constant 0 : i32
    return %c0_i32, %c0_i32_0 : i32, i32
  }
  func.func @transform_7(%arg0: i32) -> (i32, i32) {
    %c0_i32 = arith.constant 0 : i32
    %c0_i32_0 = arith.constant 0 : i32
    %c0_i32_1 = arith.constant 0 : i32
    return %c0_i32, %c0_i32_0 : i32, i32
  }
  func.func @transform_8(%arg0: i32) -> (i32, i32) {
    %c0_i32 = arith.constant 0 : i32
    %c0_i32_0 = arith.constant 0 : i32
    %c0_i32_1 = arith.constant 0 : i32
    return %c0_i32, %c0_i32_0 : i32, i32
  }
  func.func @transform_9(%arg0: i32) -> (i32, i32) {
    %c0_i32 = arith.constant 0 : i32
    %c0_i32_0 = arith.constant 0 : i32
    %c0_i32_1 = arith.constant 0 : i32
    return %c0_i32, %c0_i32_0 : i32, i32
  }
  func.func @transform_10(%arg0: i32) -> (i32, i32) {
    %c0_i32 = arith.constant 0 : i32
    %c0_i32_0 = arith.constant 0 : i32
    %c0_i32_1 = arith.constant 0 : i32
    return %c0_i32, %c0_i32_0 : i32, i32
  }
  func.func @transform_11(%arg0: i32) -> (i32, i32) {
    %c0_i32 = arith.constant 0 : i32
    %c0_i32_0 = arith.constant 0 : i32
    %c0_i32_1 = arith.constant 0 : i32
    return %c0_i32, %c0_i32_0 : i32, i32
  }
  func.func @transform_12(%arg0: i32) -> (i32, i32) {
    %c0_i32 = arith.constant 0 : i32
    %c0_i32_0 = arith.constant 0 : i32
    %c0_i32_1 = arith.constant 0 : i32
    return %c0_i32, %c0_i32_0 : i32, i32
  }
  func.func @transform_13(%arg0: i32) -> (i32, i32, i32) {
    %c0_i32 = arith.constant 0 : i32
    %c0_i32_0 = arith.constant 0 : i32
    %c0_i32_1 = arith.constant 0 : i32
    %c0_i32_2 = arith.constant 0 : i32
    return %c0_i32, %c0_i32_0, %c0_i32_1 : i32, i32, i32
  }
  func.func @transform_14(%arg0: i32) -> (i32, i32, i32) {
    %c0_i32 = arith.constant 0 : i32
    %c0_i32_0 = arith.constant 0 : i32
    %c0_i32_1 = arith.constant 0 : i32
    %c0_i32_2 = arith.constant 0 : i32
    return %c0_i32, %c0_i32_0, %c0_i32_1 : i32, i32, i32
  }
  func.func @transform_15(%arg0: i32) -> (i32, i32, i32) {
    %c0_i32 = arith.constant 0 : i32
    %c0_i32_0 = arith.constant 0 : i32
    %c0_i32_1 = arith.constant 0 : i32
    %c0_i32_2 = arith.constant 0 : i32
    return %c0_i32, %c0_i32_0, %c0_i32_1 : i32, i32, i32
  }
  func.func @transform_16(%arg0: i32) -> (i32, i32, i32) {
    %c0_i32 = arith.constant 0 : i32
    %c0_i32_0 = arith.constant 0 : i32
    %c0_i32_1 = arith.constant 0 : i32
    %c0_i32_2 = arith.constant 0 : i32
    return %c0_i32, %c0_i32_0, %c0_i32_1 : i32, i32, i32
  }
  func.func @transform_17(%arg0: i32) -> (i32, i32) {
    %c0_i32 = arith.constant 0 : i32
    %c0_i32_0 = arith.constant 0 : i32
    %c0_i32_1 = arith.constant 0 : i32
    return %c0_i32, %c0_i32_0 : i32, i32
  }
  func.func @transform_18(%arg0: i32) -> (i32, i32) {
    %c0_i32 = arith.constant 0 : i32
    %c0_i32_0 = arith.constant 0 : i32
    %c0_i32_1 = arith.constant 0 : i32
    return %c0_i32, %c0_i32_0 : i32, i32
  }
  func.func @transform_19(%arg0: i32) -> (i32, i32) {
    %c0_i32 = arith.constant 0 : i32
    %c0_i32_0 = arith.constant 0 : i32
    %c0_i32_1 = arith.constant 0 : i32
    return %c0_i32, %c0_i32_0 : i32, i32
  }
  func.func @transform_20(%arg0: i32) -> (i32, i32) {
    %c0_i32 = arith.constant 0 : i32
    %c0_i32_0 = arith.constant 0 : i32
    %c0_i32_1 = arith.constant 0 : i32
    return %c0_i32, %c0_i32_0 : i32, i32
  }
  func.func @transform_21(%arg0: i32) -> (i32, i32) {
    %c0_i32 = arith.constant 0 : i32
    %c0_i32_0 = arith.constant 0 : i32
    return %arg0, %c0_i32 : i32, i32
  }
}

</mosaic_0001>

<llo_original>
// kernel: tpu_custom_call.1
$region0: #{tpu_custom_call.1}
  #allocation0 [shape = 'u32[]', space=smem, size = 0x4, offset = 0x4, fixed_abs, tag = 'smem constant byte address 0x4 - core index']
  #allocation1 [shape = 'u32[144,128]{1,0:T(1,128)}', space=vmem, size = 0x12000, scoped, tag = 'internal scratch']
  %s0 = inlined_call_operand.vmem [shape: f32[8,1], index: 0, kind: input, shape index: {}]
  %s1 = inlined_call_operand.vmem [shape: f32[8,48], index: 1, kind: input, shape index: {}]
  %s2 = inlined_call_operand.hbm [shape: f32[1,8], index: 2, kind: input, shape index: {}]
  %s3 = inlined_call_operand.hbm [shape: f32[1,128], index: 3, kind: input, shape index: {}]
  %s4 = inlined_call_operand.vmem [shape: f32[8,128], index: 4, kind: input, shape index: {}]
  %s5 = inlined_call_operand.vmem [shape: f32[8,128], index: 5, kind: input, shape index: {}]
  %s6 = inlined_call_operand.hbm [shape: f32[1,128], index: 6, kind: input, shape index: {}]
  %s7 = inlined_call_operand.hbm [shape: f32[128,128], index: 7, kind: input, shape index: {}]
  %s8 = inlined_call_operand.hbm [shape: f32[1,128], index: 8, kind: input, shape index: {}]
  %s9 = inlined_call_operand.vmem [shape: f32[48,128], index: 9, kind: input, shape index: {}]
  %s10 = inlined_call_operand.hbm [shape: f32[1,128], index: 10, kind: input, shape index: {}]
  %s11 = inlined_call_operand.vmem [shape: f32[128,256], index: 11, kind: input, shape index: {}]
  %s12 = inlined_call_operand.vmem [shape: f32[1,256], index: 12, kind: input, shape index: {}]
  %s13 = inlined_call_operand.vmem [shape: f32[3,1,256], index: 13, kind: input, shape index: {}]
  %s14 = inlined_call_operand.vmem [shape: f32[3,1,256], index: 14, kind: input, shape index: {}]
  %s15 = inlined_call_operand.hbm [shape: f32[3,256,256], index: 15, kind: input, shape index: {}]
  %s16 = inlined_call_operand.vmem [shape: f32[3,1,256], index: 16, kind: input, shape index: {}]
  %s17 = inlined_call_operand.vmem [shape: f32[1,256], index: 17, kind: input, shape index: {}]
  %s18 = inlined_call_operand.vmem [shape: f32[1,256], index: 18, kind: input, shape index: {}]
  %s19 = inlined_call_operand.vmem [shape: f32[256,32], index: 19, kind: input, shape index: {}]
  %s20 = inlined_call_operand.vmem [shape: f32[1,32], index: 20, kind: input, shape index: {}]
  %s21 = inlined_call_operand.hbm [shape: f32[8,32], index: 21, kind: output, shape index: {}]
  %s22 = sld [smem:[#allocation0]]
  $region122: #{tpu_custom_call.1} parent=0
    _
  %s24 = ssub.s32 1, %s22
  %s25 = scalar_select 0, %s24, %s22
  $region1: #{tpu_custom_call.1} parent=0
    #allocation2 [shape = 'u8[512]{0}', space=vmem, size = 0x400, scoped, tag = 'input window, operand 2, single buffered']
    #allocation3 [shape = 's32[1]{0}', space=sflag, size = 0x4, scoped, tag = 'scoped memory for tpu_custom_call.1']
    #allocation4 [shape = 's32[1]{0}', space=sflag, size = 0x4, scoped, tag = 'scoped memory for tpu_custom_call.1']
    #allocation5 [shape = 'u8[512]{0}', space=vmem, size = 0x400, scoped, tag = 'input window, operand 3, single buffered']
    #allocation6 [shape = 's32[1]{0}', space=sflag, size = 0x4, scoped, tag = 'scoped memory for tpu_custom_call.1']
    #allocation7 [shape = 'u8[512]{0}', space=vmem, size = 0x400, scoped, tag = 'input window, operand 6, single buffered']
    #allocation8 [shape = 'u8[65536]{0}', space=vmem, size = 0x10000, scoped, tag = 'input window, operand 7, single buffered']
    #allocation9 [shape = 's32[1]{0}', space=sflag, size = 0x4, scoped, tag = 'scoped memory for tpu_custom_call.1']
    #allocation10 [shape = 'u8[512]{0}', space=vmem, size = 0x400, scoped, tag = 'input window, operand 8, single buffered']
    #allocation11 [shape = 'u8[512]{0}', space=vmem, size = 0x400, scoped, tag = 'input window, operand 10, single buffered']
    #allocation12 [shape = 's32[1]{0}', space=sflag, size = 0x4, scoped, tag = 'scoped memory for tpu_custom_call.1']
    #allocation13 [shape = 'u8[786432]{0}', space=vmem, size = 0xc0000, scoped, tag = 'input window, operand 15, single buffered']
    #allocation14 [shape = 'u8[4096]{0}', space=vmem, size = 0x1000, scoped, tag = 'output window, operand 0, single buffered']
    %26 = vsyncpa [#allocation3], 0
    %27 = vsyncpa [#allocation6], 0
    %28 = vsyncpa [#allocation9], 0
    %29 = vsyncpa [#allocation12], 0
    %30 = vsyncpa [#allocation4], 0
    // Predicated region
    $region2: #{tpu_custom_call.1} parent=1 // pred_check
      _
    $region3: #{tpu_custom_call.1} parent=1 // pred_check_branch
      %32 = sbr.rel (0) target = $region5
    $region4: #{tpu_custom_call.1} parent=1 // pred_region
      _
    $region5: #{tpu_custom_call.1} parent=1 // pred_fallthru
      _
    // Predicated region
    $region6: #{tpu_custom_call.1} parent=1 // pred_check
      _
    $region7: #{tpu_custom_call.1} parent=1 // pred_check_branch
      %34 = sbr.rel (0) target = $region9
    $region8: #{tpu_custom_call.1} parent=1 // pred_region
      _
    $region9: #{tpu_custom_call.1} parent=1 // pred_fallthru
      _
    // Predicated region
    $region10: #{tpu_custom_call.1} parent=1 // pred_check
      _
    $region11: #{tpu_custom_call.1} parent=1 // pred_check_branch
      %36 = sbr.rel (0) target = $region13
    $region12: #{tpu_custom_call.1} parent=1 // pred_region
      %s38 = ssub.s32 16, 16
      %39 = vsyncadd [#allocation3], %s38
      %s41 = sshll.u32 [#allocation2], 4
      %s42 = int_to_ptr.vmem [resolvable:$true] %s41
      %44 = dma.hbm_to_vmem [thread:$0]  %s2, 16, %s42, [#allocation3]
    $region13: #{tpu_custom_call.1} parent=1 // pred_fallthru
      _
    // Predicated region
    $region14: #{tpu_custom_call.1} parent=1 // pred_check
      _
    $region15: #{tpu_custom_call.1} parent=1 // pred_check_branch
      %46 = sbr.rel (0) target = $region17
    $region16: #{tpu_custom_call.1} parent=1 // pred_region
      %s48 = ssub.s32 16, 16
      %49 = vsyncadd [#allocation6], %s48
      %s51 = sshll.u32 [#allocation5], 4
      %s52 = int_to_ptr.vmem [resolvable:$true] %s51
      %54 = dma.hbm_to_vmem [thread:$0]  %s3, 16, %s52, [#allocation6]
    $region17: #{tpu_custom_call.1} parent=1 // pred_fallthru
      _
    // Predicated region
    $region18: #{tpu_custom_call.1} parent=1 // pred_check
      _
    $region19: #{tpu_custom_call.1} parent=1 // pred_check_branch
      %56 = sbr.rel (0) target = $region21
    $region20: #{tpu_custom_call.1} parent=1 // pred_region
      _
    $region21: #{tpu_custom_call.1} parent=1 // pred_fallthru
      _
    // Predicated region
    $region22: #{tpu_custom_call.1} parent=1 // pred_check
      _
    $region23: #{tpu_custom_call.1} parent=1 // pred_check_branch
      %58 = sbr.rel (0) target = $region25
    $region24: #{tpu_custom_call.1} parent=1 // pred_region
      _
    $region25: #{tpu_custom_call.1} parent=1 // pred_fallthru
      _
    // Predicated region
    $region26: #{tpu_custom_call.1} parent=1 // pred_check
      _
    $region27: #{tpu_custom_call.1} parent=1 // pred_check_branch
      %60 = sbr.rel (0) target = $region29
    $region28: #{tpu_custom_call.1} parent=1 // pred_region
      %s62 = ssub.s32 16, 16
      %63 = vsyncadd [#allocation6], %s62
      %s65 = sshll.u32 [#allocation7], 4
      %s66 = int_to_ptr.vmem [resolvable:$true] %s65
      %68 = dma.hbm_to_vmem [thread:$0]  %s6, 16, %s66, [#allocation6]
    $region29: #{tpu_custom_call.1} parent=1 // pred_fallthru
      _
    // Predicated region
    $region30: #{tpu_custom_call.1} parent=1 // pred_check
      _
    $region31: #{tpu_custom_call.1} parent=1 // pred_check_branch
      %70 = sbr.rel (0) target = $region33
    $region32: #{tpu_custom_call.1} parent=1 // pred_region
      %s72 = ssub.s32 2048, 2048
      %73 = vsyncadd [#allocation9], %s72
      %s74 = sshll.u32 [#allocation8], 4
      %s75 = int_to_ptr.vmem [resolvable:$true] %s74
      %80 = dma.hbm_to_vmem [thread:$0]  %s7, 2048, %s75, [#allocation9], 128, 128, 8
    $region33: #{tpu_custom_call.1} parent=1 // pred_fallthru
      _
    // Predicated region
    $region34: #{tpu_custom_call.1} parent=1 // pred_check
      _
    $region35: #{tpu_custom_call.1} parent=1 // pred_check_branch
      %82 = sbr.rel (0) target = $region37
    $region36: #{tpu_custom_call.1} parent=1 // pred_region
      %s84 = ssub.s32 16, 16
      %85 = vsyncadd [#allocation9], %s84
      %s87 = sshll.u32 [#allocation10], 4
      %s88 = int_to_ptr.vmem [resolvable:$true] %s87
      %90 = dma.hbm_to_vmem [thread:$0]  %s8, 16, %s88, [#allocation9]
    $region37: #{tpu_custom_call.1} parent=1 // pred_fallthru
      _
    // Predicated region
    $region38: #{tpu_custom_call.1} parent=1 // pred_check
      _
    $region39: #{tpu_custom_call.1} parent=1 // pred_check_branch
      %92 = sbr.rel (0) target = $region41
    $region40: #{tpu_custom_call.1} parent=1 // pred_region
      _
    $region41: #{tpu_custom_call.1} parent=1 // pred_fallthru
      _
    // Predicated region
    $region42: #{tpu_custom_call.1} parent=1 // pred_check
      _
    $region43: #{tpu_custom_call.1} parent=1 // pred_check_branch
      %94 = sbr.rel (0) target = $region45
    $region44: #{tpu_custom_call.1} parent=1 // pred_region
      %s96 = ssub.s32 16, 16
      %97 = vsyncadd [#allocation12], %s96
      %s99 = sshll.u32 [#allocation11], 4
      %s100 = int_to_ptr.vmem [resolvable:$true] %s99
      %102 = dma.hbm_to_vmem [thread:$0]  %s10, 16, %s100, [#allocation12]
    $region45: #{tpu_custom_call.1} parent=1 // pred_fallthru
      _
    // Predicated region
    $region46: #{tpu_custom_call.1} parent=1 // pred_check
      _
    $region47: #{tpu_custom_call.1} parent=1 // pred_check_branch
      %104 = sbr.rel (0) target = $region49
    $region48: #{tpu_custom_call.1} parent=1 // pred_region
      _
    $region49: #{tpu_custom_call.1} parent=1 // pred_fallthru
      _
    // Predicated region
    $region50: #{tpu_custom_call.1} parent=1 // pred_check
      _
    $region51: #{tpu_custom_call.1} parent=1 // pred_check_branch
      %106 = sbr.rel (0) target = $region53
    $region52: #{tpu_custom_call.1} parent=1 // pred_region
      _
    $region53: #{tpu_custom_call.1} parent=1 // pred_fallthru
      _
    // Predicated region
    $region54: #{tpu_custom_call.1} parent=1 // pred_check
      _
    $region55: #{tpu_custom_call.1} parent=1 // pred_check_branch
      %108 = sbr.rel (0) target = $region57
    $region56: #{tpu_custom_call.1} parent=1 // pred_region
      _
    $region57: #{tpu_custom_call.1} parent=1 // pred_fallthru
      _
    // Predicated region
    $region58: #{tpu_custom_call.1} parent=1 // pred_check
      _
    $region59: #{tpu_custom_call.1} parent=1 // pred_check_branch
      %110 = sbr.rel (0) target = $region61
    $region60: #{tpu_custom_call.1} parent=1 // pred_region
      _
    $region61: #{tpu_custom_call.1} parent=1 // pred_fallthru
      _
    // Predicated region
    $region62: #{tpu_custom_call.1} parent=1 // pred_check
      _
    $region63: #{tpu_custom_call.1} parent=1 // pred_check_branch
      %112 = sbr.rel (0) target = $region65
    $region64: #{tpu_custom_call.1} parent=1 // pred_region
      %s114 = ssub.s32 24576, 24576
      %115 = vsyncadd [#allocation12], %s114
      %s116 = sshll.u32 [#allocation13], 4
      %s117 = int_to_ptr.vmem [resolvable:$true] %s116
      %122 = dma.hbm_to_vmem [thread:$0]  %s15, 24576, %s117, [#allocation12], 256, 256, 16
    $region65: #{tpu_custom_call.1} parent=1 // pred_fallthru
      _
    // Predicated region
    $region66: #{tpu_custom_call.1} parent=1 // pred_check
      _
    $region67: #{tpu_custom_call.1} parent=1 // pred_check_branch
      %124 = sbr.rel (0) target = $region69
    $region68: #{tpu_custom_call.1} parent=1 // pred_region
      _
    $region69: #{tpu_custom_call.1} parent=1 // pred_fallthru
      _
    // Predicated region
    $region70: #{tpu_custom_call.1} parent=1 // pred_check
      _
    $region71: #{tpu_custom_call.1} parent=1 // pred_check_branch
      %126 = sbr.rel (0) target = $region73
    $region72: #{tpu_custom_call.1} parent=1 // pred_region
      _
    $region73: #{tpu_custom_call.1} parent=1 // pred_fallthru
      _
    // Predicated region
    $region74: #{tpu_custom_call.1} parent=1 // pred_check
      _
    $region75: #{tpu_custom_call.1} parent=1 // pred_check_branch
      %128 = sbr.rel (0) target = $region77
    $region76: #{tpu_custom_call.1} parent=1 // pred_region
      _
    $region77: #{tpu_custom_call.1} parent=1 // pred_fallthru
      _
    // Predicated region
    $region78: #{tpu_custom_call.1} parent=1 // pred_check
      _
    $region79: #{tpu_custom_call.1} parent=1 // pred_check_branch
      %130 = sbr.rel (0) target = $region81
    $region80: #{tpu_custom_call.1} parent=1 // pred_region
      _
    $region81: #{tpu_custom_call.1} parent=1 // pred_fallthru
      _
    // Predicated region
    $region82: #{tpu_custom_call.1} parent=1 // pred_check
      _
    $region83: #{tpu_custom_call.1} parent=1 // pred_check_branch
      %132 = sbr.rel (0) target = $region85
    $region84: #{tpu_custom_call.1} parent=1 // pred_region
      _
    $region85: #{tpu_custom_call.1} parent=1 // pred_fallthru
      _
    // Predicated region
    $region86: #{tpu_custom_call.1} parent=1 // pred_check
      _
    $region87: #{tpu_custom_call.1} parent=1 // pred_check_branch
      %134 = sbr.rel (0) target = $region89
    $region88: #{tpu_custom_call.1} parent=1 // pred_region
      %135 = dma.done [#allocation3], 16
    $region89: #{tpu_custom_call.1} parent=1 // pred_fallthru
      _
    // Predicated region
    $region90: #{tpu_custom_call.1} parent=1 // pred_check
      _
    $region91: #{tpu_custom_call.1} parent=1 // pred_check_branch
      %137 = sbr.rel (0) target = $region93
    $region92: #{tpu_custom_call.1} parent=1 // pred_region
      %138 = dma.done [#allocation6], 16
    $region93: #{tpu_custom_call.1} parent=1 // pred_fallthru
      _
    // Predicated region
    $region94: #{tpu_custom_call.1} parent=1 // pred_check
      _
    $region95: #{tpu_custom_call.1} parent=1 // pred_check_branch
      %140 = sbr.rel (0) target = $region97
    $region96: #{tpu_custom_call.1} parent=1 // pred_region
      %141 = dma.done [#allocation6], 16
    $region97: #{tpu_custom_call.1} parent=1 // pred_fallthru
      _
    // Predicated region
    $region98: #{tpu_custom_call.1} parent=1 // pred_check
      _
    $region99: #{tpu_custom_call.1} parent=1 // pred_check_branch
      %143 = sbr.rel (0) target = $region101
    $region100: #{tpu_custom_call.1} parent=1 // pred_region
      %144 = dma.done [#allocation9], 2048
    $region101: #{tpu_custom_call.1} parent=1 // pred_fallthru
      _
    // Predicated region
    $region102: #{tpu_custom_call.1} parent=1 // pred_check
      _
    $region103: #{tpu_custom_call.1} parent=1 // pred_check_branch
      %146 = sbr.rel (0) target = $region105
    $region104: #{tpu_custom_call.1} parent=1 // pred_region
      %147 = dma.done [#allocation9], 16
    $region105: #{tpu_custom_call.1} parent=1 // pred_fallthru
      _
    // Predicated region
    $region106: #{tpu_custom_call.1} parent=1 // pred_check
      _
    $region107: #{tpu_custom_call.1} parent=1 // pred_check_branch
      %149 = sbr.rel (0) target = $region109
    $region108: #{tpu_custom_call.1} parent=1 // pred_region
      %150 = dma.done [#allocation12], 16
    $region109: #{tpu_custom_call.1} parent=1 // pred_fallthru
      _
    // Predicated region
    $region110: #{tpu_custom_call.1} parent=1 // pred_check
      _
    $region111: #{tpu_custom_call.1} parent=1 // pred_check_branch
      %152 = sbr.rel (0) target = $region113
    $region112: #{tpu_custom_call.1} parent=1 // pred_region
      %153 = dma.done [#allocation12], 24576
    $region113: #{tpu_custom_call.1} parent=1 // pred_fallthru
      _
    %v154 = vld [vmem:[%s0] sm:$0xff]
    %v155 = vld [vmem:[#allocation2] sm:$0x1]
    %157 = vset.pattern.permute.xlu0 0
    %158 = vperm.xlu0 %157, %v154
    %v159 = vpop.permute.xlu0 %158
    %v162 = vlaneseq
    %v163 = vshrl.u32 %v162, 7
    %v164 = vsub.s32 0, %v163
    %v165 = vrot.slane %v155, %v164
    %v167 = vmul.f32 %v159, %v165
    %v168 = vmul.f32 %v167, 6.2831855
    %v169 = vand.u32 2147483647, %v168
    %vm170 = vcmp.le.f32.partialorder %v169, 0.7853982
    %vm171 = vcmp.lt.s32.totalorder %v168, 0
    %v172 = vand.u32 %v168, 2139095040
    %v173 = vshrl.u32 %v172, 23
    %v174 = vsub.s32 %v173, 127
    %v175 = vand.u32 2147483647, %v168
    %v176 = vand.u32 %v175, 8388607
    %v177 = vor.u32 %v176, 8388608
    %v178 = vsub.s32 0, %v177
    %v179 = vadd.s32 %v174, 1
    %vm180 = vcmp.gt.s32.totalorder %v179, 0
    %v181 = vsel %vm180, %v179, 0
    %v182 = vshrl.u32 %v181, 5
    %v183 = vand.u32 %v181, 31
    %v184 = vsub.s32 32, %v183
    %v185 = vshrl.u32 683565275, %v184
    %v186 = vshll.u32 683565275, %v183
    %v187 = vshrl.u32 2475754826, %v184
    %v188 = vor.u32 %v186, %v187
    %v189 = vshll.u32 2475754826, %v183
    %v190 = vshrl.u32 2131351028, %v184
    %v191 = vor.u32 %v189, %v190
    %v192 = vshll.u32 2131351028, %v183
    %v193 = vshrl.u32 2102212464, %v184
    %v194 = vor.u32 %v192, %v193
    %v195 = vshll.u32 2102212464, %v183
    %v196 = vshrl.u32 920167782, %v184
    %v197 = vor.u32 %v195, %v196
    %v198 = vshll.u32 920167782, %v183
    %v199 = vshrl.u32 1326507024, %v184
    %v200 = vor.u32 %v198, %v199
    %vm201 = vcmp.lt.s32.totalorder %v182, 1
    %vm202 = vcmp.lt.s32.totalorder %v182, 2
    %vm203 = vcmp.lt.s32.totalorder %v182, 3
    %vm204 = vcmp.lt.s32.totalorder %v182, 4
    %v205 = vsel %vm201, %v185, %v188
    %v206 = vsel %vm204, %v194, 2102212464
    %v207 = vsel %vm203, %v191, %v206
    %v208 = vsel %vm202, %v205, %v207
    %v209 = vsel %vm201, %v188, %v191
    %v210 = vsel %vm204, %v197, 920167782
    %v211 = vsel %vm203, %v194, %v210
    %v212 = vsel %vm202, %v209, %v211
    %v213 = vsel %vm201, %v191, %v194
    %v214 = vsel %vm204, %v200, 1326507024
    %v215 = vsel %vm203, %v197, %v214
    %v216 = vsel %vm202, %v213, %v215
    %v217 = vshll.u32 %v177, 8
    %v218 = vmul.u32.u64.compose %v217, %v216
    %v219 = vextract.low.u32 %v218
    %v220 = vextract.high.u32 %v218
    %v221 = vmul.u32.u64.compose %v217, %v212
    %v222 = vextract.low.u32 %v221
    %v223 = vextract.high.u32 %v221
    %v224 = vmul.u32 %v217, %v208
    %v225 = vadd.s32 %v220, %v222
    %vm226 = vc.u32 %v220, %v222
    %v227 = vadd.s32 %v223, 1
    %v228 = vsel %vm226, %v227, %v223
    %v229 = vadd.s32 %v224, %v228
    %v230 = vadd.s32 %v229, 536870912
    %v231 = vshrl.u32 %v230, 30
    %v232 = vshll.u32 %v231, 30
    %v233 = vsub.s32 %v229, %v232
    %vm234 = vcmp.lt.s32.totalorder %v233, 0
    %v235 = vsub.s32 0, %v233
    %v236 = vsel %vm234, %v235, %v233
    %v237 = vclz %v236
    %v238 = vsub.s32 %v237, 2
    %vm239 = vcmp.gt.s32.totalorder 0, %v238
    %v240 = vsel %vm239, 0, %v238
    %v241 = vsub.s32 32, %v240
    %v242 = vshll.u32 %v233, %v240
    %v243 = vshrl.u32 %v225, %v241
    %v244 = vor.u32 %v242, %v243
    %v245 = vsub.s32 4294967266, %v240
    %v246 = vadd.s32 %v245, 127
    %v247 = vshll.u32 %v246, 23
    %v248 = vor.u32 4788187, %v247
    %v249 = vand.u32 2147483647, %v248
    %v251 = vcvt.s32.f32 %v244
    %v252 = vmul.f32 %v251, %v249
    %v253 = vxor.u32 %v252, 2147483648
    %v254 = vsel %vm171, %v253, %v252
    %v255 = vsub.s32 4, %v231
    %v256 = vsel %vm171, %v255, %v231
    %v257 = vsel %vm170, %v168, %v254
    %v258 = vsel %vm170, 0, %v256
    %v259 = vcosq.f32.pop %v257
    %v260 = vsinq.f32.pop %v257
    %vm261 = vweird.f32 %v168
    %v262 = vadd.s32 %v258, 3
    %v263 = vand.u32 %v262, 3
    %vm264 = vcmp.lt.s32.totalorder %v263, 2
    %vm265 = vcmp.eq.s32.totalorder %v263, 0
    %v266 = vxor.u32 %v260, 2147483648
    %v267 = vsel %vm265, %v259, %v266
    %vm268 = vcmp.eq.s32.totalorder %v263, 2
    %v269 = vxor.u32 %v259, 2147483648
    %v270 = vsel %vm268, %v269, %v260
    %v271 = vsel %vm264, %v267, %v270
    %v272 = vsel %vm261, nan, %v271
    %v273 = vand.u32 2147483647, %v168
    %vm274 = vcmp.le.f32.partialorder %v273, 0.7853982
    %vm275 = vcmp.lt.s32.totalorder %v168, 0
    %v276 = vand.u32 %v168, 2139095040
    %v277 = vshrl.u32 %v276, 23
    %v278 = vsub.s32 %v277, 127
    %v279 = vand.u32 2147483647, %v168
    %v280 = vand.u32 %v279, 8388607
    %v281 = vor.u32 %v280, 8388608
    %v282 = vsub.s32 0, %v281
    %v283 = vadd.s32 %v278, 1
    %vm284 = vcmp.gt.s32.totalorder %v283, 0
    %v285 = vsel %vm284, %v283, 0
    %v286 = vshrl.u32 %v285, 5
    %v287 = vand.u32 %v285, 31
    %v288 = vsub.s32 32, %v287
    %v289 = vshrl.u32 683565275, %v288
    %v290 = vshll.u32 683565275, %v287
    %v291 = vshrl.u32 2475754826, %v288
    %v292 = vor.u32 %v290, %v291
    %v293 = vshll.u32 2475754826, %v287
    %v294 = vshrl.u32 2131351028, %v288
    %v295 = vor.u32 %v293, %v294
    %v296 = vshll.u32 2131351028, %v287
    %v297 = vshrl.u32 2102212464, %v288
    %v298 = vor.u32 %v296, %v297
    %v299 = vshll.u32 2102212464, %v287
    %v300 = vshrl.u32 920167782, %v288
    %v301 = vor.u32 %v299, %v300
    %v302 = vshll.u32 920167782, %v287
    %v303 = vshrl.u32 1326507024, %v288
    %v304 = vor.u32 %v302, %v303
    %vm305 = vcmp.lt.s32.totalorder %v286, 1
    %vm306 = vcmp.lt.s32.totalorder %v286, 2
    %vm307 = vcmp.lt.s32.totalorder %v286, 3
    %vm308 = vcmp.lt.s32.totalorder %v286, 4
    %v309 = vsel %vm305, %v289, %v292
    %v310 = vsel %vm308, %v298, 2102212464
    %v311 = vsel %vm307, %v295, %v310
    %v312 = vsel %vm306, %v309, %v311
    %v313 = vsel %vm305, %v292, %v295
    %v314 = vsel %vm308, %v301, 920167782
    %v315 = vsel %vm307, %v298, %v314
    %v316 = vsel %vm306, %v313, %v315
    %v317 = vsel %vm305, %v295, %v298
    %v318 = vsel %vm308, %v304, 1326507024
    %v319 = vsel %vm307, %v301, %v318
    %v320 = vsel %vm306, %v317, %v319
    %v321 = vshll.u32 %v281, 8
    %v322 = vmul.u32.u64.compose %v321, %v320
    %v323 = vextract.low.u32 %v322
    %v324 = vextract.high.u32 %v322
    %v325 = vmul.u32.u64.compose %v321, %v316
    %v326 = vextract.low.u32 %v325
    %v327 = vextract.high.u32 %v325
    %v328 = vmul.u32 %v321, %v312
    %v329 = vadd.s32 %v324, %v326
    %vm330 = vc.u32 %v324, %v326
    %v331 = vadd.s32 %v327, 1
    %v332 = vsel %vm330, %v331, %v327
    %v333 = vadd.s32 %v328, %v332
    %v334 = vadd.s32 %v333, 536870912
    %v335 = vshrl.u32 %v334, 30
    %v336 = vshll.u32 %v335, 30
    %v337 = vsub.s32 %v333, %v336
    %vm338 = vcmp.lt.s32.totalorder %v337, 0
    %v339 = vsub.s32 0, %v337
    %v340 = vsel %vm338, %v339, %v337
    %v341 = vclz %v340
    %v342 = vsub.s32 %v341, 2
    %vm343 = vcmp.gt.s32.totalorder 0, %v342
    %v344 = vsel %vm343, 0, %v342
    %v345 = vsub.s32 32, %v344
    %v346 = vshll.u32 %v337, %v344
    %v347 = vshrl.u32 %v329, %v345
    %v348 = vor.u32 %v346, %v347
    %v349 = vsub.s32 4294967266, %v344
    %v350 = vadd.s32 %v349, 127
    %v351 = vshll.u32 %v350, 23
    %v352 = vor.u32 4788187, %v351
    %v353 = vand.u32 2147483647, %v352
    %v355 = vcvt.s32.f32 %v348
    %v356 = vmul.f32 %v355, %v353
    %v357 = vxor.u32 %v356, 2147483648
    %v358 = vsel %vm275, %v357, %v356
    %v359 = vsub.s32 4, %v335
    %v360 = vsel %vm275, %v359, %v335
    %v361 = vsel %vm274, %v168, %v358
    %v362 = vsel %vm274, 0, %v360
    %v363 = vcosq.f32.pop %v361
    %v364 = vsinq.f32.pop %v361
    %vm365 = vweird.f32 %v168
    %v366 = vand.u32 %v362, 3
    %vm367 = vcmp.lt.s32.totalorder %v366, 2
    %vm368 = vcmp.eq.s32.totalorder %v366, 0
    %v369 = vxor.u32 %v364, 2147483648
    %v370 = vsel %vm368, %v363, %v369
    %vm371 = vcmp.eq.s32.totalorder %v366, 2
    %v372 = vxor.u32 %v363, 2147483648
    %v373 = vsel %vm371, %v372, %v364
    %v374 = vsel %vm367, %v370, %v373
    %v375 = vsel %vm365, nan, %v374
    %v376 = vld [vmem:[#allocation5] sm:$0x1]
    %v378 = vlaneseq
    %v379 = vshrl.u32 %v378, 7
    %v380 = vsub.s32 0, %v379
    %v381 = vrot.slane %v376, %v380
    %v383 = vmul.f32 %v159, %v381
    %v384 = vld [vmem:[%s4] sm:$0xff]
    %vm385 = vcmask 64512
    %v387 = vsel %vm385, %v272, 0
    %389 = vmatprep.subr.mxu0 0.0
    %390 = vmatpush1.msra.mxu0 0.0
    %391 = vmatprep.subr.mxu0 0.0
    %392 = vmatpush1.msra.mxu0 0.0
    %393 = vmatprep.subr.mxu0 0.0
    %394 = vmatpush1.msra.mxu0 0.0
    %395 = vmatprep.subr.mxu0 0.0
    %396 = vmatpush1.msra.mxu0 0.0
    %397 = vmatprep.subr.mxu0 0.0
    %398 = vmatpush1.msra.mxu0 0.0
    %399 = vmatprep.subr.mxu0 0.0
    %400 = vmatpush1.msra.mxu0 0.0
    %401 = vmatprep.subr.mxu0 0.0
    %402 = vmatpush1.msra.mxu0 0.0
    %403 = vmatprep.subr.mxu0 0.0
    %404 = vmatpush1.msra.mxu0 0.0
    %405 = vmatprep.subr.mxu0 0.0
    %406 = vmatpush1.msra.mxu0 0.0
    %407 = vmatprep.subr.mxu0 0.0
    %408 = vmatpush1.msra.mxu0 0.0
    %409 = vmatprep.subr.mxu0 0.0
    %410 = vmatpush1.msra.mxu0 0.0
    %411 = vmatprep.subr.mxu0 0.0
    %412 = vmatpush1.msra.mxu0 0.0
    %413 = vmatprep.subr.mxu0 0.0
    %414 = vmatpush1.msra.mxu0 0.0
    %415 = vmatprep.subr.mxu0 0.0
    %416 = vmatpush1.msra.mxu0 0.0
    %417 = vmatprep.subr.mxu0 0.0
    %418 = vmatpush1.msra.mxu0 0.0
    %419 = vmatprep.subr.mxu0 0.0
    %420 = vmatpush1.msra.mxu0 %v384
    %421 = vmatprep.subr.mxu0 0.0
    %422 = vmatpush2.msra.mxu0 0.0
    %423 = vmatprep.subr.mxu0 0.0
    %424 = vmatpush2.msra.mxu0 0.0
    %425 = vmatprep.subr.mxu0 0.0
    %426 = vmatpush2.msra.mxu0 0.0
    %427 = vmatprep.subr.mxu0 0.0
    %428 = vmatpush2.msra.mxu0 0.0
    %429 = vmatprep.subr.mxu0 0.0
    %430 = vmatpush2.msra.mxu0 0.0
    %431 = vmatprep.subr.mxu0 0.0
    %432 = vmatpush2.msra.mxu0 0.0
    %433 = vmatprep.subr.mxu0 0.0
    %434 = vmatpush2.msra.mxu0 0.0
    %435 = vmatprep.subr.mxu0 0.0
    %436 = vmatpush2.msra.mxu0 0.0
    %437 = vmatprep.subr.mxu0 0.0
    %438 = vmatpush2.msra.mxu0 0.0
    %439 = vmatprep.subr.mxu0 0.0
    %440 = vmatpush2.msra.mxu0 0.0
    %441 = vmatprep.subr.mxu0 0.0
    %442 = vmatpush2.msra.mxu0 0.0
    %443 = vmatprep.subr.mxu0 0.0
    %444 = vmatpush2.msra.mxu0 0.0
    %445 = vmatprep.subr.mxu0 0.0
    %446 = vmatpush2.msra.mxu0 0.0
    %447 = vmatprep.subr.mxu0 0.0
    %448 = vmatpush2.msra.mxu0 0.0
    %449 = vmatprep.subr.mxu0 0.0
    %450 = vmatpush2.msra.mxu0 0.0
    %451 = vmatprep.subr.mxu0 0.0
    %452 = vmatpush2.msra.mxu0 0.0
    %453 = vmatprep.mubr.f32.mxu0 0.0
    %454 = vmatmul.mubr.f32.gmra.mxu0 %v387
    %v455 = vpop.f32.mrf.mxu0
    %v456 = vadd.f32 0.0, %v455
    %v457 = vpop.f32.mrf.mxu0
    %458 = vdwg.mxu0
    %v459 = vadd.f32 %v383, %v456
    %v460 = vld [vmem:[%s5] sm:$0xff]
    %v462 = vsel %vm385, %v375, 0
    %464 = vmatprep.subr.mxu0 0.0
    %465 = vmatpush1.msra.mxu0 0.0
    %466 = vmatprep.subr.mxu0 0.0
    %467 = vmatpush1.msra.mxu0 0.0
    %468 = vmatprep.subr.mxu0 0.0
    %469 = vmatpush1.msra.mxu0 0.0
    %470 = vmatprep.subr.mxu0 0.0
    %471 = vmatpush1.msra.mxu0 0.0
    %472 = vmatprep.subr.mxu0 0.0
    %473 = vmatpush1.msra.mxu0 0.0
    %474 = vmatprep.subr.mxu0 0.0
    %475 = vmatpush1.msra.mxu0 0.0
    %476 = vmatprep.subr.mxu0 0.0
    %477 = vmatpush1.msra.mxu0 0.0
    %478 = vmatprep.subr.mxu0 0.0
    %479 = vmatpush1.msra.mxu0 0.0
    %480 = vmatprep.subr.mxu0 0.0
    %481 = vmatpush1.msra.mxu0 0.0
    %482 = vmatprep.subr.mxu0 0.0
    %483 = vmatpush1.msra.mxu0 0.0
    %484 = vmatprep.subr.mxu0 0.0
    %485 = vmatpush1.msra.mxu0 0.0
    %486 = vmatprep.subr.mxu0 0.0
    %487 = vmatpush1.msra.mxu0 0.0
    %488 = vmatprep.subr.mxu0 0.0
    %489 = vmatpush1.msra.mxu0 0.0
    %490 = vmatprep.subr.mxu0 0.0
    %491 = vmatpush1.msra.mxu0 0.0
    %492 = vmatprep.subr.mxu0 0.0
    %493 = vmatpush1.msra.mxu0 0.0
    %494 = vmatprep.subr.mxu0 0.0
    %495 = vmatpush1.msra.mxu0 %v460
    %496 = vmatprep.subr.mxu0 0.0
    %497 = vmatpush2.msra.mxu0 0.0
    %498 = vmatprep.subr.mxu0 0.0
    %499 = vmatpush2.msra.mxu0 0.0
    %500 = vmatprep.subr.mxu0 0.0
    %501 = vmatpush2.msra.mxu0 0.0
    %502 = vmatprep.subr.mxu0 0.0
    %503 = vmatpush2.msra.mxu0 0.0
    %504 = vmatprep.subr.mxu0 0.0
    %505 = vmatpush2.msra.mxu0 0.0
    %506 = vmatprep.subr.mxu0 0.0
    %507 = vmatpush2.msra.mxu0 0.0
    %508 = vmatprep.subr.mxu0 0.0
    %509 = vmatpush2.msra.mxu0 0.0
    %510 = vmatprep.subr.mxu0 0.0
    %511 = vmatpush2.msra.mxu0 0.0
    %512 = vmatprep.subr.mxu0 0.0
    %513 = vmatpush2.msra.mxu0 0.0
    %514 = vmatprep.subr.mxu0 0.0
    %515 = vmatpush2.msra.mxu0 0.0
    %516 = vmatprep.subr.mxu0 0.0
    %517 = vmatpush2.msra.mxu0 0.0
    %518 = vmatprep.subr.mxu0 0.0
    %519 = vmatpush2.msra.mxu0 0.0
    %520 = vmatprep.subr.mxu0 0.0
    %521 = vmatpush2.msra.mxu0 0.0
    %522 = vmatprep.subr.mxu0 0.0
    %523 = vmatpush2.msra.mxu0 0.0
    %524 = vmatprep.subr.mxu0 0.0
    %525 = vmatpush2.msra.mxu0 0.0
    %526 = vmatprep.subr.mxu0 0.0
    %527 = vmatpush2.msra.mxu0 0.0
    %528 = vmatprep.mubr.f32.mxu0 0.0
    %529 = vmatmul.mubr.f32.gmra.mxu0 %v462
    %v530 = vpop.f32.mrf.mxu0
    %v531 = vadd.f32 0.0, %v530
    %v532 = vpop.f32.mrf.mxu0
    %533 = vdwg.mxu0
    %v534 = vadd.f32 %v459, %v531
    %v535 = vld [vmem:[#allocation7] sm:$0x1]
    %v537 = vlaneseq
    %v538 = vshrl.u32 %v537, 7
    %v539 = vsub.s32 0, %v538
    %v540 = vrot.slane %v535, %v539
    %v542 = vadd.f32 %v534, %v540
    %v543 = vsub.f32 0.0, %v542
    %v544 = vmul.f32 %v543, 1.442695
    %v545 = vpow.pop %v544
    %v546 = vadd.f32 %v545, 1.0
    %v547 = vrcp.pop %v546
    %v548 = vmul.f32 1.0, %v547
    %v549 = vmul.f32 %v542, %v548
    %v550 = vld [vmem:[#allocation8] sm:$0xff]
    %v551 = vld [vmem:[#allocation8 + $0x8] sm:$0xff]
    %v552 = vld [vmem:[#allocation8 + $0x10] sm:$0xff]
    %v553 = vld [vmem:[#allocation8 + $0x18] sm:$0xff]
    %v554 = vld [vmem:[#allocation8 + $0x20] sm:$0xff]
    %v555 = vld [vmem:[#allocation8 + $0x28] sm:$0xff]
    %v556 = vld [vmem:[#allocation8 + $0x30] sm:$0xff]
    %v557 = vld [vmem:[#allocation8 + $0x38] sm:$0xff]
    %v558 = vld [vmem:[#allocation8 + $0x40] sm:$0xff]
    %v559 = vld [vmem:[#allocation8 + $0x48] sm:$0xff]
    %v560 = vld [vmem:[#allocation8 + $0x50] sm:$0xff]
    %v561 = vld [vmem:[#allocation8 + $0x58] sm:$0xff]
    %v562 = vld [vmem:[#allocation8 + $0x60] sm:$0xff]
    %v563 = vld [vmem:[#allocation8 + $0x68] sm:$0xff]
    %v564 = vld [vmem:[#allocation8 + $0x70] sm:$0xff]
    %v565 = vld [vmem:[#allocation8 + $0x78] sm:$0xff]
    %v566 = vld [vmem:[#allocation10] sm:$0x1]
    %v568 = vlaneseq
    %v569 = vshrl.u32 %v568, 7
    %v570 = vsub.s32 0, %v569
    %v571 = vrot.slane %v566, %v570
    %573 = vmatprep.subr.mxu0 0.0
    %574 = vmatpush1.msra.mxu0 %v565
    %575 = vmatprep.subr.mxu0 0.0
    %576 = vmatpush1.msra.mxu0 %v564
    %577 = vmatprep.subr.mxu0 0.0
    %578 = vmatpush1.msra.mxu0 %v563
    %579 = vmatprep.subr.mxu0 0.0
    %580 = vmatpush1.msra.mxu0 %v562
    %581 = vmatprep.subr.mxu0 0.0
    %582 = vmatpush1.msra.mxu0 %v561
    %583 = vmatprep.subr.mxu0 0.0
    %584 = vmatpush1.msra.mxu0 %v560
    %585 = vmatprep.subr.mxu0 0.0
    %586 = vmatpush1.msra.mxu0 %v559
    %587 = vmatprep.subr.mxu0 0.0
    %588 = vmatpush1.msra.mxu0 %v558
    %589 = vmatprep.subr.mxu0 0.0
    %590 = vmatpush1.msra.mxu0 %v557
    %591 = vmatprep.subr.mxu0 0.0
    %592 = vmatpush1.msra.mxu0 %v556
    %593 = vmatprep.subr.mxu0 0.0
    %594 = vmatpush1.msra.mxu0 %v555
    %595 = vmatprep.subr.mxu0 0.0
    %596 = vmatpush1.msra.mxu0 %v554
    %597 = vmatprep.subr.mxu0 0.0
    %598 = vmatpush1.msra.mxu0 %v553
    %599 = vmatprep.subr.mxu0 0.0
    %600 = vmatpush1.msra.mxu0 %v552
    %601 = vmatprep.subr.mxu0 0.0
    %602 = vmatpush1.msra.mxu0 %v551
    %603 = vmatprep.subr.mxu0 0.0
    %604 = vmatpush1.msra.mxu0 %v550
    %605 = vmatprep.subr.mxu0 0.0
    %606 = vmatpush2.msra.mxu0 0.0
    %607 = vmatprep.subr.mxu0 0.0
    %608 = vmatpush2.msra.mxu0 0.0
    %609 = vmatprep.subr.mxu0 0.0
    %610 = vmatpush2.msra.mxu0 0.0
    %611 = vmatprep.subr.mxu0 0.0
    %612 = vmatpush2.msra.mxu0 0.0
    %613 = vmatprep.subr.mxu0 0.0
    %614 = vmatpush2.msra.mxu0 0.0
    %615 = vmatprep.subr.mxu0 0.0
    %616 = vmatpush2.msra.mxu0 0.0
    %617 = vmatprep.subr.mxu0 0.0
    %618 = vmatpush2.msra.mxu0 0.0
    %619 = vmatprep.subr.mxu0 0.0
    %620 = vmatpush2.msra.mxu0 0.0
    %621 = vmatprep.subr.mxu0 0.0
    %622 = vmatpush2.msra.mxu0 0.0
    %623 = vmatprep.subr.mxu0 0.0
    %624 = vmatpush2.msra.mxu0 0.0
    %625 = vmatprep.subr.mxu0 0.0
    %626 = vmatpush2.msra.mxu0 0.0
    %627 = vmatprep.subr.mxu0 0.0
    %628 = vmatpush2.msra.mxu0 0.0
    %629 = vmatprep.subr.mxu0 0.0
    %630 = vmatpush2.msra.mxu0 0.0
    %631 = vmatprep.subr.mxu0 0.0
    %632 = vmatpush2.msra.mxu0 0.0
    %633 = vmatprep.subr.mxu0 0.0
    %634 = vmatpush2.msra.mxu0 0.0
    %635 = vmatprep.subr.mxu0 0.0
    %636 = vmatpush2.msra.mxu0 0.0
    %637 = vmatprep.mubr.f32.mxu0 0.0
    %638 = vmatmul.mubr.f32.gmra.mxu0 %v549
    %v639 = vpop.f32.mrf.mxu0
    %v640 = vadd.f32 %v571, %v639
    %v641 = vpop.f32.mrf.mxu0
    %642 = vdwg.mxu0
    %v643 = vld [vmem:[%s1] sm:$0xff]
    %v644 = vld [vmem:[%s9] sm:$0xff]
    %v645 = vld [vmem:[%s9 + $0x8] sm:$0xff]
    %v646 = vld [vmem:[%s9 + $0x10] sm:$0xff]
    %v647 = vld [vmem:[%s9 + $0x18] sm:$0xff]
    %v648 = vld [vmem:[%s9 + $0x20] sm:$0xff]
    %v649 = vld [vmem:[%s9 + $0x28] sm:$0xff]
    %v650 = vld [vmem:[#allocation11] sm:$0x1]
    %v652 = vlaneseq
    %v653 = vshrl.u32 %v652, 7
    %v654 = vsub.s32 0, %v653
    %v655 = vrot.slane %v650, %v654
    %vm657 = vcmask 392192
    %v659 = vsel %vm657, %v643, 0
    %661 = vmatprep.subr.mxu0 0.0
    %662 = vmatpush1.msra.mxu0 0.0
    %663 = vmatprep.subr.mxu0 0.0
    %664 = vmatpush1.msra.mxu0 0.0
    %665 = vmatprep.subr.mxu0 0.0
    %666 = vmatpush1.msra.mxu0 0.0
    %667 = vmatprep.subr.mxu0 0.0
    %668 = vmatpush1.msra.mxu0 0.0
    %669 = vmatprep.subr.mxu0 0.0
    %670 = vmatpush1.msra.mxu0 0.0
    %671 = vmatprep.subr.mxu0 0.0
    %672 = vmatpush1.msra.mxu0 0.0
    %673 = vmatprep.subr.mxu0 0.0
    %674 = vmatpush1.msra.mxu0 0.0
    %675 = vmatprep.subr.mxu0 0.0
    %676 = vmatpush1.msra.mxu0 0.0
    %677 = vmatprep.subr.mxu0 0.0
    %678 = vmatpush1.msra.mxu0 0.0
    %679 = vmatprep.subr.mxu0 0.0
    %680 = vmatpush1.msra.mxu0 0.0
    %681 = vmatprep.subr.mxu0 0.0
    %682 = vmatpush1.msra.mxu0 %v649
    %683 = vmatprep.subr.mxu0 0.0
    %684 = vmatpush1.msra.mxu0 %v648
    %685 = vmatprep.subr.mxu0 0.0
    %686 = vmatpush1.msra.mxu0 %v647
    %687 = vmatprep.subr.mxu0 0.0
    %688 = vmatpush1.msra.mxu0 %v646
    %689 = vmatprep.subr.mxu0 0.0
    %690 = vmatpush1.msra.mxu0 %v645
    %691 = vmatprep.subr.mxu0 0.0
    %692 = vmatpush1.msra.mxu0 %v644
    %693 = vmatprep.subr.mxu0 0.0
    %694 = vmatpush2.msra.mxu0 0.0
    %695 = vmatprep.subr.mxu0 0.0
    %696 = vmatpush2.msra.mxu0 0.0
    %697 = vmatprep.subr.mxu0 0.0
    %698 = vmatpush2.msra.mxu0 0.0
    %699 = vmatprep.subr.mxu0 0.0
    %700 = vmatpush2.msra.mxu0 0.0
    %701 = vmatprep.subr.mxu0 0.0
    %702 = vmatpush2.msra.mxu0 0.0
    %703 = vmatprep.subr.mxu0 0.0
    %704 = vmatpush2.msra.mxu0 0.0
    %705 = vmatprep.subr.mxu0 0.0
    %706 = vmatpush2.msra.mxu0 0.0
    %707 = vmatprep.subr.mxu0 0.0
    %708 = vmatpush2.msra.mxu0 0.0
    %709 = vmatprep.subr.mxu0 0.0
    %710 = vmatpush2.msra.mxu0 0.0
    %711 = vmatprep.subr.mxu0 0.0
    %712 = vmatpush2.msra.mxu0 0.0
    %713 = vmatprep.subr.mxu0 0.0
    %714 = vmatpush2.msra.mxu0 0.0
    %715 = vmatprep.subr.mxu0 0.0
    %716 = vmatpush2.msra.mxu0 0.0
    %717 = vmatprep.subr.mxu0 0.0
    %718 = vmatpush2.msra.mxu0 0.0
    %719 = vmatprep.subr.mxu0 0.0
    %720 = vmatpush2.msra.mxu0 0.0
    %721 = vmatprep.subr.mxu0 0.0
    %722 = vmatpush2.msra.mxu0 0.0
    %723 = vmatprep.subr.mxu0 0.0
    %724 = vmatpush2.msra.mxu0 0.0
    %725 = vmatprep.mubr.f32.mxu0 0.0
    %726 = vmatmul.mubr.f32.gmra.mxu0 %v659
    %v727 = vpop.f32.mrf.mxu0
    %v728 = vadd.f32 %v655, %v727
    %v729 = vpop.f32.mrf.mxu0
    %730 = vdwg.mxu0
    %v731 = vadd.f32 %v728, %v640
    %v732 = vld [vmem:[%s11] sm:$0xff]
    %v733 = vld [vmem:[%s11 + $0x8] sm:$0xff]
    %v734 = vld [vmem:[%s11 + $0x10] sm:$0xff]
    %v735 = vld [vmem:[%s11 + $0x18] sm:$0xff]
    %v736 = vld [vmem:[%s11 + $0x20] sm:$0xff]
    %v737 = vld [vmem:[%s11 + $0x28] sm:$0xff]
    %v738 = vld [vmem:[%s11 + $0x30] sm:$0xff]
    %v739 = vld [vmem:[%s11 + $0x38] sm:$0xff]
    %v740 = vld [vmem:[%s11 + $0x40] sm:$0xff]
    %v741 = vld [vmem:[%s11 + $0x48] sm:$0xff]
    %v742 = vld [vmem:[%s11 + $0x50] sm:$0xff]
    %v743 = vld [vmem:[%s11 + $0x58] sm:$0xff]
    %v744 = vld [vmem:[%s11 + $0x60] sm:$0xff]
    %v745 = vld [vmem:[%s11 + $0x68] sm:$0xff]
    %v746 = vld [vmem:[%s11 + $0x70] sm:$0xff]
    %v747 = vld [vmem:[%s11 + $0x78] sm:$0xff]
    %v748 = vld [vmem:[%s11 + $0x80] sm:$0xff]
    %v749 = vld [vmem:[%s11 + $0x88] sm:$0xff]
    %v750 = vld [vmem:[%s11 + $0x90] sm:$0xff]
    %v751 = vld [vmem:[%s11 + $0x98] sm:$0xff]
    %v752 = vld [vmem:[%s11 + $0xa0] sm:$0xff]
    %v753 = vld [vmem:[%s11 + $0xa8] sm:$0xff]
    %v754 = vld [vmem:[%s11 + $0xb0] sm:$0xff]
    %v755 = vld [vmem:[%s11 + $0xb8] sm:$0xff]
    %v756 = vld [vmem:[%s11 + $0xc0] sm:$0xff]
    %v757 = vld [vmem:[%s11 + $0xc8] sm:$0xff]
    %v758 = vld [vmem:[%s11 + $0xd0] sm:$0xff]
    %v759 = vld [vmem:[%s11 + $0xd8] sm:$0xff]
    %v760 = vld [vmem:[%s11 + $0xe0] sm:$0xff]
    %v761 = vld [vmem:[%s11 + $0xe8] sm:$0xff]
    %v762 = vld [vmem:[%s11 + $0xf0] sm:$0xff]
    %v763 = vld [vmem:[%s11 + $0xf8] sm:$0xff]
    %v764 = vld [vmem:[%s12] sm:$0x3]
    %v766 = vlaneseq
    %v767 = vshrl.u32 %v766, 7
    %v768 = vsub.s32 0, %v767
    %v769 = vrot.slane %v764, %v768
    %v770 = vlaneseq
    %v771 = vshrl.u32 %v770, 7
    %v772 = vsub.s32 1, %v771
    %v773 = vrot.slane %v764, %v772
    %776 = vmatprep.subr.mxu0 %v763
    %777 = vmatpush1.msra.mxu0 %v762
    %778 = vmatprep.subr.mxu0 %v761
    %779 = vmatpush1.msra.mxu0 %v760
    %780 = vmatprep.subr.mxu0 %v759
    %781 = vmatpush1.msra.mxu0 %v758
    %782 = vmatprep.subr.mxu0 %v757
    %783 = vmatpush1.msra.mxu0 %v756
    %784 = vmatprep.subr.mxu0 %v755
    %785 = vmatpush1.msra.mxu0 %v754
    %786 = vmatprep.subr.mxu0 %v753
    %787 = vmatpush1.msra.mxu0 %v752
    %788 = vmatprep.subr.mxu0 %v751
    %789 = vmatpush1.msra.mxu0 %v750
    %790 = vmatprep.subr.mxu0 %v749
    %791 = vmatpush1.msra.mxu0 %v748
    %792 = vmatprep.subr.mxu0 %v747
    %793 = vmatpush1.msra.mxu0 %v746
    %794 = vmatprep.subr.mxu0 %v745
    %795 = vmatpush1.msra.mxu0 %v744
    %796 = vmatprep.subr.mxu0 %v743
    %797 = vmatpush1.msra.mxu0 %v742
    %798 = vmatprep.subr.mxu0 %v741
    %799 = vmatpush1.msra.mxu0 %v740
    %800 = vmatprep.subr.mxu0 %v739
    %801 = vmatpush1.msra.mxu0 %v738
    %802 = vmatprep.subr.mxu0 %v737
    %803 = vmatpush1.msra.mxu0 %v736
    %804 = vmatprep.subr.mxu0 %v735
    %805 = vmatpush1.msra.mxu0 %v734
    %806 = vmatprep.subr.mxu0 %v733
    %807 = vmatpush1.msra.mxu0 %v732
    %808 = vmatprep.subr.mxu0 0.0
    %809 = vmatpush2.msra.mxu0 0.0
    %810 = vmatprep.subr.mxu0 0.0
    %811 = vmatpush2.msra.mxu0 0.0
    %812 = vmatprep.subr.mxu0 0.0
    %813 = vmatpush2.msra.mxu0 0.0
    %814 = vmatprep.subr.mxu0 0.0
    %815 = vmatpush2.msra.mxu0 0.0
    %816 = vmatprep.subr.mxu0 0.0
    %817 = vmatpush2.msra.mxu0 0.0
    %818 = vmatprep.subr.mxu0 0.0
    %819 = vmatpush2.msra.mxu0 0.0
    %820 = vmatprep.subr.mxu0 0.0
    %821 = vmatpush2.msra.mxu0 0.0
    %822 = vmatprep.subr.mxu0 0.0
    %823 = vmatpush2.msra.mxu0 0.0
    %824 = vmatprep.subr.mxu0 0.0
    %825 = vmatpush2.msra.mxu0 0.0
    %826 = vmatprep.subr.mxu0 0.0
    %827 = vmatpush2.msra.mxu0 0.0
    %828 = vmatprep.subr.mxu0 0.0
    %829 = vmatpush2.msra.mxu0 0.0
    %830 = vmatprep.subr.mxu0 0.0
    %831 = vmatpush2.msra.mxu0 0.0
    %832 = vmatprep.subr.mxu0 0.0
    %833 = vmatpush2.msra.mxu0 0.0
    %834 = vmatprep.subr.mxu0 0.0
    %835 = vmatpush2.msra.mxu0 0.0
    %836 = vmatprep.subr.mxu0 0.0
    %837 = vmatpush2.msra.mxu0 0.0
    %838 = vmatprep.subr.mxu0 0.0
    %839 = vmatpush2.msra.mxu0 0.0
    %840 = vmatprep.mubr.f32.mxu0 0.0
    %841 = vmatmul.mubr.f32.gmra.mxu0 %v731
    %v842 = vpop.f32.mrf.mxu0
    %v843 = vadd.f32 %v769, %v842
    %v844 = vpop.f32.mrf.mxu0
    %v845 = vadd.f32 %v773, %v844
    %846 = vdwg.mxu0
    %v847 = vld [vmem:[%s13] sm:$0x3]
    %v848 = vld [vmem:[%s14] sm:$0x3]
    %v849 = vadd.f32 %v843, %v845
    %850 = vadd.xlane.f32.xlu0 %v849
    %v851 = vpop.xlane.xlu0 %850
    %v852 = vrcp.pop 256.0
    %v853 = vmul.f32 %v851, %v852
    %v854 = vsub.f32 %v843, %v853
    %v855 = vsub.f32 %v845, %v853
    %v856 = vmul.f32 %v854, %v854
    %v857 = vmul.f32 %v855, %v855
    %v858 = vadd.f32 %v856, %v857
    %859 = vadd.xlane.f32.xlu0 %v858
    %v860 = vpop.xlane.xlu0 %859
    %v861 = vmul.f32 %v860, %v852
    %v862 = vadd.f32 %v861, 1e-05
    %v863 = vrsqrt.pop %v862
    %v864 = vmul.f32 %v854, %v863
    %v865 = vmul.f32 %v855, %v863
    %v867 = vlaneseq
    %v868 = vshrl.u32 %v867, 7
    %v869 = vsub.s32 0, %v868
    %v870 = vrot.slane %v847, %v869
    %v871 = vlaneseq
    %v872 = vshrl.u32 %v871, 7
    %v873 = vsub.s32 1, %v872
    %v874 = vrot.slane %v847, %v873
    %v877 = vmul.f32 %v864, %v870
    %v878 = vmul.f32 %v865, %v874
    %v880 = vlaneseq
    %v881 = vshrl.u32 %v880, 7
    %v882 = vsub.s32 0, %v881
    %v883 = vrot.slane %v848, %v882
    %v884 = vlaneseq
    %v885 = vshrl.u32 %v884, 7
    %v886 = vsub.s32 1, %v885
    %v887 = vrot.slane %v848, %v886
    %v890 = vadd.f32 %v877, %v883
    %v891 = vadd.f32 %v878, %v887
    %v892 = vmax.f32 %v890, 0.0
    %v893 = vmax.f32 %v891, 0.0
    %v894 = vld [vmem:[#allocation13] sm:$0xff]
    %v895 = vld [vmem:[#allocation13 + $0x8] sm:$0xff]
    %v896 = vld [vmem:[#allocation13 + $0x10] sm:$0xff]
    %v897 = vld [vmem:[#allocation13 + $0x18] sm:$0xff]
    %v898 = vld [vmem:[#allocation13 + $0x20] sm:$0xff]
    %v899 = vld [vmem:[#allocation13 + $0x28] sm:$0xff]
    %v900 = vld [vmem:[#allocation13 + $0x30] sm:$0xff]
    %v901 = vld [vmem:[#allocation13 + $0x38] sm:$0xff]
    %v902 = vld [vmem:[#allocation13 + $0x40] sm:$0xff]
    %v903 = vld [vmem:[#allocation13 + $0x48] sm:$0xff]
    %v904 = vld [vmem:[#allocation13 + $0x50] sm:$0xff]
    %v905 = vld [vmem:[#allocation13 + $0x58] sm:$0xff]
    %v906 = vld [vmem:[#allocation13 + $0x60] sm:$0xff]
    %v907 = vld [vmem:[#allocation13 + $0x68] sm:$0xff]
    %v908 = vld [vmem:[#allocation13 + $0x70] sm:$0xff]
    %v909 = vld [vmem:[#allocation13 + $0x78] sm:$0xff]
    %v910 = vld [vmem:[#allocation13 + $0x80] sm:$0xff]
    %v911 = vld [vmem:[#allocation13 + $0x88] sm:$0xff]
    %v912 = vld [vmem:[#allocation13 + $0x90] sm:$0xff]
    %v913 = vld [vmem:[#allocation13 + $0x98] sm:$0xff]
    %v914 = vld [vmem:[#allocation13 + $0xa0] sm:$0xff]
    %v915 = vld [vmem:[#allocation13 + $0xa8] sm:$0xff]
    %v916 = vld [vmem:[#allocation13 + $0xb0] sm:$0xff]
    %v917 = vld [vmem:[#allocation13 + $0xb8] sm:$0xff]
    %v918 = vld [vmem:[#allocation13 + $0xc0] sm:$0xff]
    %v919 = vld [vmem:[#allocation13 + $0xc8] sm:$0xff]
    %v920 = vld [vmem:[#allocation13 + $0xd0] sm:$0xff]
    %v921 = vld [vmem:[#allocation13 + $0xd8] sm:$0xff]
    %v922 = vld [vmem:[#allocation13 + $0xe0] sm:$0xff]
    %v923 = vld [vmem:[#allocation13 + $0xe8] sm:$0xff]
    %v924 = vld [vmem:[#allocation13 + $0xf0] sm:$0xff]
    %v925 = vld [vmem:[#allocation13 + $0xf8] sm:$0xff]
    %v926 = vld [vmem:[#allocation13 + $0x100] sm:$0xff]
    %v927 = vld [vmem:[#allocation13 + $0x108] sm:$0xff]
    %v928 = vld [vmem:[#allocation13 + $0x110] sm:$0xff]
    %v929 = vld [vmem:[#allocation13 + $0x118] sm:$0xff]
    %v930 = vld [vmem:[#allocation13 + $0x120] sm:$0xff]
    %v931 = vld [vmem:[#allocation13 + $0x128] sm:$0xff]
    %v932 = vld [vmem:[#allocation13 + $0x130] sm:$0xff]
    %v933 = vld [vmem:[#allocation13 + $0x138] sm:$0xff]
    %v934 = vld [vmem:[#allocation13 + $0x140] sm:$0xff]
    %v935 = vld [vmem:[#allocation13 + $0x148] sm:$0xff]
    %v936 = vld [vmem:[#allocation13 + $0x150] sm:$0xff]
    %v937 = vld [vmem:[#allocation13 + $0x158] sm:$0xff]
    %v938 = vld [vmem:[#allocation13 + $0x160] sm:$0xff]
    %v939 = vld [vmem:[#allocation13 + $0x168] sm:$0xff]
    %v940 = vld [vmem:[#allocation13 + $0x170] sm:$0xff]
    %v941 = vld [vmem:[#allocation13 + $0x178] sm:$0xff]
    %v942 = vld [vmem:[#allocation13 + $0x180] sm:$0xff]
    %v943 = vld [vmem:[#allocation13 + $0x188] sm:$0xff]
    %v944 = vld [vmem:[#allocation13 + $0x190] sm:$0xff]
    %v945 = vld [vmem:[#allocation13 + $0x198] sm:$0xff]
    %v946 = vld [vmem:[#allocation13 + $0x1a0] sm:$0xff]
    %v947 = vld [vmem:[#allocation13 + $0x1a8] sm:$0xff]
    %v948 = vld [vmem:[#allocation13 + $0x1b0] sm:$0xff]
    %v949 = vld [vmem:[#allocation13 + $0x1b8] sm:$0xff]
    %v950 = vld [vmem:[#allocation13 + $0x1c0] sm:$0xff]
    %v951 = vld [vmem:[#allocation13 + $0x1c8] sm:$0xff]
    %v952 = vld [vmem:[#allocation13 + $0x1d0] sm:$0xff]
    %v953 = vld [vmem:[#allocation13 + $0x1d8] sm:$0xff]
    %v954 = vld [vmem:[#allocation13 + $0x1e0] sm:$0xff]
    %v955 = vld [vmem:[#allocation13 + $0x1e8] sm:$0xff]
    %v956 = vld [vmem:[#allocation13 + $0x1f0] sm:$0xff]
    %v957 = vld [vmem:[#allocation13 + $0x1f8] sm:$0xff]
    %958 = vmatprep.subr.mxu0 %v925
    %959 = vmatpush1.msra.mxu0 %v924
    %960 = vmatprep.subr.mxu0 %v923
    %961 = vmatpush1.msra.mxu0 %v922
    %962 = vmatprep.subr.mxu0 %v921
    %963 = vmatpush1.msra.mxu0 %v920
    %964 = vmatprep.subr.mxu0 %v919
    %965 = vmatpush1.msra.mxu0 %v918
    %966 = vmatprep.subr.mxu0 %v917
    %967 = vmatpush1.msra.mxu0 %v916
    %968 = vmatprep.subr.mxu0 %v915
    %969 = vmatpush1.msra.mxu0 %v914
    %970 = vmatprep.subr.mxu0 %v913
    %971 = vmatpush1.msra.mxu0 %v912
    %972 = vmatprep.subr.mxu0 %v911
    %973 = vmatpush1.msra.mxu0 %v910
    %974 = vmatprep.subr.mxu0 %v909
    %975 = vmatpush1.msra.mxu0 %v908
    %976 = vmatprep.subr.mxu0 %v907
    %977 = vmatpush1.msra.mxu0 %v906
    %978 = vmatprep.subr.mxu0 %v905
    %979 = vmatpush1.msra.mxu0 %v904
    %980 = vmatprep.subr.mxu0 %v903
    %981 = vmatpush1.msra.mxu0 %v902
    %982 = vmatprep.subr.mxu0 %v901
    %983 = vmatpush1.msra.mxu0 %v900
    %984 = vmatprep.subr.mxu0 %v899
    %985 = vmatpush1.msra.mxu0 %v898
    %986 = vmatprep.subr.mxu0 %v897
    %987 = vmatpush1.msra.mxu0 %v896
    %988 = vmatprep.subr.mxu0 %v895
    %989 = vmatpush1.msra.mxu0 %v894
    %990 = vmatprep.subr.mxu0 %v957
    %991 = vmatpush2.msra.mxu0 %v956
    %992 = vmatprep.subr.mxu0 %v955
    %993 = vmatpush2.msra.mxu0 %v954
    %994 = vmatprep.subr.mxu0 %v953
    %995 = vmatpush2.msra.mxu0 %v952
    %996 = vmatprep.subr.mxu0 %v951
    %997 = vmatpush2.msra.mxu0 %v950
    %998 = vmatprep.subr.mxu0 %v949
    %999 = vmatpush2.msra.mxu0 %v948
    %1000 = vmatprep.subr.mxu0 %v947
    %1001 = vmatpush2.msra.mxu0 %v946
    %1002 = vmatprep.subr.mxu0 %v945
    %1003 = vmatpush2.msra.mxu0 %v944
    %1004 = vmatprep.subr.mxu0 %v943
    %1005 = vmatpush2.msra.mxu0 %v942
    %1006 = vmatprep.subr.mxu0 %v941
    %1007 = vmatpush2.msra.mxu0 %v940
    %1008 = vmatprep.subr.mxu0 %v939
    %1009 = vmatpush2.msra.mxu0 %v938
    %1010 = vmatprep.subr.mxu0 %v937
    %1011 = vmatpush2.msra.mxu0 %v936
    %1012 = vmatprep.subr.mxu0 %v935
    %1013 = vmatpush2.msra.mxu0 %v934
    %1014 = vmatprep.subr.mxu0 %v933
    %1015 = vmatpush2.msra.mxu0 %v932
    %1016 = vmatprep.subr.mxu0 %v931
    %1017 = vmatpush2.msra.mxu0 %v930
    %1018 = vmatprep.subr.mxu0 %v929
    %1019 = vmatpush2.msra.mxu0 %v928
    %1020 = vmatprep.subr.mxu0 %v927
    %1021 = vmatpush2.msra.mxu0 %v926
    %1022 = vmatprep.mubr.f32.mxu0 %v893
    %1023 = vmatmul.mubr.f32.gmra.mxu0 %v892
    %v1024 = vpop.f32.mrf.mxu0
    %v1025 = vadd.f32 0.0, %v1024
    %v1026 = vpop.f32.mrf.mxu0
    %v1027 = vadd.f32 0.0, %v1026
    %1028 = vdwg.mxu0
    %v1029 = vadd.f32 %v843, %v1025
    %v1030 = vadd.f32 %v845, %v1027
    %v1031 = vld [vmem:[%s16] sm:$0x3]
    %v1033 = vlaneseq
    %v1034 = vshrl.u32 %v1033, 7
    %v1035 = vsub.s32 0, %v1034
    %v1036 = vrot.slane %v1031, %v1035
    %v1037 = vlaneseq
    %v1038 = vshrl.u32 %v1037, 7
    %v1039 = vsub.s32 1, %v1038
    %v1040 = vrot.slane %v1031, %v1039
    %v1043 = vadd.f32 %v1029, %v1036
    %v1044 = vadd.f32 %v1030, %v1040
    %s1045 = scalar_lea.vmem %s13, 2
    %v1046 = vld [vmem:[%s1045] sm:$0x3]
    %s1047 = scalar_lea.vmem %s14, 2
    %v1048 = vld [vmem:[%s1047] sm:$0x3]
    %v1049 = vadd.f32 %v1043, %v1044
    %1050 = vadd.xlane.f32.xlu0 %v1049
    %v1051 = vpop.xlane.xlu0 %1050
    %v1052 = vmul.f32 %v1051, %v852
    %v1053 = vsub.f32 %v1043, %v1052
    %v1054 = vsub.f32 %v1044, %v1052
    %v1055 = vmul.f32 %v1053, %v1053
    %v1056 = vmul.f32 %v1054, %v1054
    %v1057 = vadd.f32 %v1055, %v1056
    %1058 = vadd.xlane.f32.xlu0 %v1057
    %v1059 = vpop.xlane.xlu0 %1058
    %v1060 = vmul.f32 %v1059, %v852
    %v1061 = vadd.f32 %v1060, 1e-05
    %v1062 = vrsqrt.pop %v1061
    %v1063 = vmul.f32 %v1053, %v1062
    %v1064 = vmul.f32 %v1054, %v1062
    %v1066 = vlaneseq
    %v1067 = vshrl.u32 %v1066, 7
    %v1068 = vsub.s32 0, %v1067
    %v1069 = vrot.slane %v1046, %v1068
    %v1070 = vlaneseq
    %v1071 = vshrl.u32 %v1070, 7
    %v1072 = vsub.s32 1, %v1071
    %v1073 = vrot.slane %v1046, %v1072
    %v1076 = vmul.f32 %v1063, %v1069
    %v1077 = vmul.f32 %v1064, %v1073
    %v1079 = vlaneseq
    %v1080 = vshrl.u32 %v1079, 7
    %v1081 = vsub.s32 0, %v1080
    %v1082 = vrot.slane %v1048, %v1081
    %v1083 = vlaneseq
    %v1084 = vshrl.u32 %v1083, 7
    %v1085 = vsub.s32 1, %v1084
    %v1086 = vrot.slane %v1048, %v1085
    %v1089 = vadd.f32 %v1076, %v1082
    %v1090 = vadd.f32 %v1077, %v1086
    %v1091 = vmax.f32 %v1089, 0.0
    %v1092 = vmax.f32 %v1090, 0.0
    %s1093 = scalar_lea.vmem [#allocation13], 512
    %v1094 = vld [vmem:[%s1093] sm:$0xff]
    %v1095 = vld [vmem:[%s1093 + $0x8] sm:$0xff]
    %v1096 = vld [vmem:[%s1093 + $0x10] sm:$0xff]
    %v1097 = vld [vmem:[%s1093 + $0x18] sm:$0xff]
    %v1098 = vld [vmem:[%s1093 + $0x20] sm:$0xff]
    %v1099 = vld [vmem:[%s1093 + $0x28] sm:$0xff]
    %v1100 = vld [vmem:[%s1093 + $0x30] sm:$0xff]
    %v1101 = vld [vmem:[%s1093 + $0x38] sm:$0xff]
    %v1102 = vld [vmem:[%s1093 + $0x40] sm:$0xff]
    %v1103 = vld [vmem:[%s1093 + $0x48] sm:$0xff]
    %v1104 = vld [vmem:[%s1093 + $0x50] sm:$0xff]
    %v1105 = vld [vmem:[%s1093 + $0x58] sm:$0xff]
    %v1106 = vld [vmem:[%s1093 + $0x60] sm:$0xff]
    %v1107 = vld [vmem:[%s1093 + $0x68] sm:$0xff]
    %v1108 = vld [vmem:[%s1093 + $0x70] sm:$0xff]
    %v1109 = vld [vmem:[%s1093 + $0x78] sm:$0xff]
    %v1110 = vld [vmem:[%s1093 + $0x80] sm:$0xff]
    %v1111 = vld [vmem:[%s1093 + $0x88] sm:$0xff]
    %v1112 = vld [vmem:[%s1093 + $0x90] sm:$0xff]
    %v1113 = vld [vmem:[%s1093 + $0x98] sm:$0xff]
    %v1114 = vld [vmem:[%s1093 + $0xa0] sm:$0xff]
    %v1115 = vld [vmem:[%s1093 + $0xa8] sm:$0xff]
    %v1116 = vld [vmem:[%s1093 + $0xb0] sm:$0xff]
    %v1117 = vld [vmem:[%s1093 + $0xb8] sm:$0xff]
    %v1118 = vld [vmem:[%s1093 + $0xc0] sm:$0xff]
    %v1119 = vld [vmem:[%s1093 + $0xc8] sm:$0xff]
    %v1120 = vld [vmem:[%s1093 + $0xd0] sm:$0xff]
    %v1121 = vld [vmem:[%s1093 + $0xd8] sm:$0xff]
    %v1122 = vld [vmem:[%s1093 + $0xe0] sm:$0xff]
    %v1123 = vld [vmem:[%s1093 + $0xe8] sm:$0xff]
    %v1124 = vld [vmem:[%s1093 + $0xf0] sm:$0xff]
    %v1125 = vld [vmem:[%s1093 + $0xf8] sm:$0xff]
    %v1126 = vld [vmem:[%s1093 + $0x100] sm:$0xff]
    %v1127 = vld [vmem:[%s1093 + $0x108] sm:$0xff]
    %v1128 = vld [vmem:[%s1093 + $0x110] sm:$0xff]
    %v1129 = vld [vmem:[%s1093 + $0x118] sm:$0xff]
    %v1130 = vld [vmem:[%s1093 + $0x120] sm:$0xff]
    %v1131 = vld [vmem:[%s1093 + $0x128] sm:$0xff]
    %v1132 = vld [vmem:[%s1093 + $0x130] sm:$0xff]
    %v1133 = vld [vmem:[%s1093 + $0x138] sm:$0xff]
    %v1134 = vld [vmem:[%s1093 + $0x140] sm:$0xff]
    %v1135 = vld [vmem:[%s1093 + $0x148] sm:$0xff]
    %v1136 = vld [vmem:[%s1093 + $0x150] sm:$0xff]
    %v1137 = vld [vmem:[%s1093 + $0x158] sm:$0xff]
    %v1138 = vld [vmem:[%s1093 + $0x160] sm:$0xff]
    %v1139 = vld [vmem:[%s1093 + $0x168] sm:$0xff]
    %v1140 = vld [vmem:[%s1093 + $0x170] sm:$0xff]
    %v1141 = vld [vmem:[%s1093 + $0x178] sm:$0xff]
    %v1142 = vld [vmem:[%s1093 + $0x180] sm:$0xff]
    %v1143 = vld [vmem:[%s1093 + $0x188] sm:$0xff]
    %v1144 = vld [vmem:[%s1093 + $0x190] sm:$0xff]
    %v1145 = vld [vmem:[%s1093 + $0x198] sm:$0xff]
    %v1146 = vld [vmem:[%s1093 + $0x1a0] sm:$0xff]
    %v1147 = vld [vmem:[%s1093 + $0x1a8] sm:$0xff]
    %v1148 = vld [vmem:[%s1093 + $0x1b0] sm:$0xff]
    %v1149 = vld [vmem:[%s1093 + $0x1b8] sm:$0xff]
    %v1150 = vld [vmem:[%s1093 + $0x1c0] sm:$0xff]
    %v1151 = vld [vmem:[%s1093 + $0x1c8] sm:$0xff]
    %v1152 = vld [vmem:[%s1093 + $0x1d0] sm:$0xff]
    %v1153 = vld [vmem:[%s1093 + $0x1d8] sm:$0xff]
    %v1154 = vld [vmem:[%s1093 + $0x1e0] sm:$0xff]
    %v1155 = vld [vmem:[%s1093 + $0x1e8] sm:$0xff]
    %v1156 = vld [vmem:[%s1093 + $0x1f0] sm:$0xff]
    %v1157 = vld [vmem:[%s1093 + $0x1f8] sm:$0xff]
    %1158 = vmatprep.subr.mxu0 %v1125
    %1159 = vmatpush1.msra.mxu0 %v1124
    %1160 = vmatprep.subr.mxu0 %v1123
    %1161 = vmatpush1.msra.mxu0 %v1122
    %1162 = vmatprep.subr.mxu0 %v1121
    %1163 = vmatpush1.msra.mxu0 %v1120
    %1164 = vmatprep.subr.mxu0 %v1119
    %1165 = vmatpush1.msra.mxu0 %v1118
    %1166 = vmatprep.subr.mxu0 %v1117
    %1167 = vmatpush1.msra.mxu0 %v1116
    %1168 = vmatprep.subr.mxu0 %v1115
    %1169 = vmatpush1.msra.mxu0 %v1114
    %1170 = vmatprep.subr.mxu0 %v1113
    %1171 = vmatpush1.msra.mxu0 %v1112
    %1172 = vmatprep.subr.mxu0 %v1111
    %1173 = vmatpush1.msra.mxu0 %v1110
    %1174 = vmatprep.subr.mxu0 %v1109
    %1175 = vmatpush1.msra.mxu0 %v1108
    %1176 = vmatprep.subr.mxu0 %v1107
    %1177 = vmatpush1.msra.mxu0 %v1106
    %1178 = vmatprep.subr.mxu0 %v1105
    %1179 = vmatpush1.msra.mxu0 %v1104
    %1180 = vmatprep.subr.mxu0 %v1103
    %1181 = vmatpush1.msra.mxu0 %v1102
    %1182 = vmatprep.subr.mxu0 %v1101
    %1183 = vmatpush1.msra.mxu0 %v1100
    %1184 = vmatprep.subr.mxu0 %v1099
    %1185 = vmatpush1.msra.mxu0 %v1098
    %1186 = vmatprep.subr.mxu0 %v1097
    %1187 = vmatpush1.msra.mxu0 %v1096
    %1188 = vmatprep.subr.mxu0 %v1095
    %1189 = vmatpush1.msra.mxu0 %v1094
    %1190 = vmatprep.subr.mxu0 %v1157
    %1191 = vmatpush2.msra.mxu0 %v1156
    %1192 = vmatprep.subr.mxu0 %v1155
    %1193 = vmatpush2.msra.mxu0 %v1154
    %1194 = vmatprep.subr.mxu0 %v1153
    %1195 = vmatpush2.msra.mxu0 %v1152
    %1196 = vmatprep.subr.mxu0 %v1151
    %1197 = vmatpush2.msra.mxu0 %v1150
    %1198 = vmatprep.subr.mxu0 %v1149
    %1199 = vmatpush2.msra.mxu0 %v1148
    %1200 = vmatprep.subr.mxu0 %v1147
    %1201 = vmatpush2.msra.mxu0 %v1146
    %1202 = vmatprep.subr.mxu0 %v1145
    %1203 = vmatpush2.msra.mxu0 %v1144
    %1204 = vmatprep.subr.mxu0 %v1143
    %1205 = vmatpush2.msra.mxu0 %v1142
    %1206 = vmatprep.subr.mxu0 %v1141
    %1207 = vmatpush2.msra.mxu0 %v1140
    %1208 = vmatprep.subr.mxu0 %v1139
    %1209 = vmatpush2.msra.mxu0 %v1138
    %1210 = vmatprep.subr.mxu0 %v1137
    %1211 = vmatpush2.msra.mxu0 %v1136
    %1212 = vmatprep.subr.mxu0 %v1135
    %1213 = vmatpush2.msra.mxu0 %v1134
    %1214 = vmatprep.subr.mxu0 %v1133
    %1215 = vmatpush2.msra.mxu0 %v1132
    %1216 = vmatprep.subr.mxu0 %v1131
    %1217 = vmatpush2.msra.mxu0 %v1130
    %1218 = vmatprep.subr.mxu0 %v1129
    %1219 = vmatpush2.msra.mxu0 %v1128
    %1220 = vmatprep.subr.mxu0 %v1127
    %1221 = vmatpush2.msra.mxu0 %v1126
    %1222 = vmatprep.mubr.f32.mxu0 %v1092
    %1223 = vmatmul.mubr.f32.gmra.mxu0 %v1091
    %v1224 = vpop.f32.mrf.mxu0
    %v1225 = vadd.f32 0.0, %v1224
    %v1226 = vpop.f32.mrf.mxu0
    %v1227 = vadd.f32 0.0, %v1226
    %1228 = vdwg.mxu0
    %v1229 = vadd.f32 %v1043, %v1225
    %v1230 = vadd.f32 %v1044, %v1227
    %s1231 = scalar_lea.vmem %s16, 2
    %v1232 = vld [vmem:[%s1231] sm:$0x3]
    %v1234 = vlaneseq
    %v1235 = vshrl.u32 %v1234, 7
    %v1236 = vsub.s32 0, %v1235
    %v1237 = vrot.slane %v1232, %v1236
    %v1238 = vlaneseq
    %v1239 = vshrl.u32 %v1238, 7
    %v1240 = vsub.s32 1, %v1239
    %v1241 = vrot.slane %v1232, %v1240
    %v1244 = vadd.f32 %v1229, %v1237
    %v1245 = vadd.f32 %v1230, %v1241
    %s1246 = scalar_lea.vmem %s13, 4
    %v1247 = vld [vmem:[%s1246] sm:$0x3]
    %s1248 = scalar_lea.vmem %s14, 4
    %v1249 = vld [vmem:[%s1248] sm:$0x3]
    %v1250 = vadd.f32 %v1244, %v1245
    %1251 = vadd.xlane.f32.xlu0 %v1250
    %v1252 = vpop.xlane.xlu0 %1251
    %v1253 = vmul.f32 %v1252, %v852
    %v1254 = vsub.f32 %v1244, %v1253
    %v1255 = vsub.f32 %v1245, %v1253
    %v1256 = vmul.f32 %v1254, %v1254
    %v1257 = vmul.f32 %v1255, %v1255
    %v1258 = vadd.f32 %v1256, %v1257
    %1259 = vadd.xlane.f32.xlu0 %v1258
    %v1260 = vpop.xlane.xlu0 %1259
    %v1261 = vmul.f32 %v1260, %v852
    %v1262 = vadd.f32 %v1261, 1e-05
    %v1263 = vrsqrt.pop %v1262
    %v1264 = vmul.f32 %v1254, %v1263
    %v1265 = vmul.f32 %v1255, %v1263
    %v1267 = vlaneseq
    %v1268 = vshrl.u32 %v1267, 7
    %v1269 = vsub.s32 0, %v1268
    %v1270 = vrot.slane %v1247, %v1269
    %v1271 = vlaneseq
    %v1272 = vshrl.u32 %v1271, 7
    %v1273 = vsub.s32 1, %v1272
    %v1274 = vrot.slane %v1247, %v1273
    %v1277 = vmul.f32 %v1264, %v1270
    %v1278 = vmul.f32 %v1265, %v1274
    %v1280 = vlaneseq
    %v1281 = vshrl.u32 %v1280, 7
    %v1282 = vsub.s32 0, %v1281
    %v1283 = vrot.slane %v1249, %v1282
    %v1284 = vlaneseq
    %v1285 = vshrl.u32 %v1284, 7
    %v1286 = vsub.s32 1, %v1285
    %v1287 = vrot.slane %v1249, %v1286
    %v1290 = vadd.f32 %v1277, %v1283
    %v1291 = vadd.f32 %v1278, %v1287
    %v1292 = vmax.f32 %v1290, 0.0
    %v1293 = vmax.f32 %v1291, 0.0
    %s1294 = scalar_lea.vmem [#allocation13], 1024
    %v1295 = vld [vmem:[%s1294] sm:$0xff]
    %v1296 = vld [vmem:[%s1294 + $0x8] sm:$0xff]
    %v1297 = vld [vmem:[%s1294 + $0x10] sm:$0xff]
    %v1298 = vld [vmem:[%s1294 + $0x18] sm:$0xff]
    %v1299 = vld [vmem:[%s1294 + $0x20] sm:$0xff]
    %v1300 = vld [vmem:[%s1294 + $0x28] sm:$0xff]
    %v1301 = vld [vmem:[%s1294 + $0x30] sm:$0xff]
    %v1302 = vld [vmem:[%s1294 + $0x38] sm:$0xff]
    %v1303 = vld [vmem:[%s1294 + $0x40] sm:$0xff]
    %v1304 = vld [vmem:[%s1294 + $0x48] sm:$0xff]
    %v1305 = vld [vmem:[%s1294 + $0x50] sm:$0xff]
    %v1306 = vld [vmem:[%s1294 + $0x58] sm:$0xff]
    %v1307 = vld [vmem:[%s1294 + $0x60] sm:$0xff]
    %v1308 = vld [vmem:[%s1294 + $0x68] sm:$0xff]
    %v1309 = vld [vmem:[%s1294 + $0x70] sm:$0xff]
    %v1310 = vld [vmem:[%s1294 + $0x78] sm:$0xff]
    %v1311 = vld [vmem:[%s1294 + $0x80] sm:$0xff]
    %v1312 = vld [vmem:[%s1294 + $0x88] sm:$0xff]
    %v1313 = vld [vmem:[%s1294 + $0x90] sm:$0xff]
    %v1314 = vld [vmem:[%s1294 + $0x98] sm:$0xff]
    %v1315 = vld [vmem:[%s1294 + $0xa0] sm:$0xff]
    %v1316 = vld [vmem:[%s1294 + $0xa8] sm:$0xff]
    %v1317 = vld [vmem:[%s1294 + $0xb0] sm:$0xff]
    %v1318 = vld [vmem:[%s1294 + $0xb8] sm:$0xff]
    %v1319 = vld [vmem:[%s1294 + $0xc0] sm:$0xff]
    %v1320 = vld [vmem:[%s1294 + $0xc8] sm:$0xff]
    %v1321 = vld [vmem:[%s1294 + $0xd0] sm:$0xff]
    %v1322 = vld [vmem:[%s1294 + $0xd8] sm:$0xff]
    %v1323 = vld [vmem:[%s1294 + $0xe0] sm:$0xff]
    %v1324 = vld [vmem:[%s1294 + $0xe8] sm:$0xff]
    %v1325 = vld [vmem:[%s1294 + $0xf0] sm:$0xff]
    %v1326 = vld [vmem:[%s1294 + $0xf8] sm:$0xff]
    %v1327 = vld [vmem:[%s1294 + $0x100] sm:$0xff]
    %v1328 = vld [vmem:[%s1294 + $0x108] sm:$0xff]
    %v1329 = vld [vmem:[%s1294 + $0x110] sm:$0xff]
    %v1330 = vld [vmem:[%s1294 + $0x118] sm:$0xff]
    %v1331 = vld [vmem:[%s1294 + $0x120] sm:$0xff]
    %v1332 = vld [vmem:[%s1294 + $0x128] sm:$0xff]
    %v1333 = vld [vmem:[%s1294 + $0x130] sm:$0xff]
    %v1334 = vld [vmem:[%s1294 + $0x138] sm:$0xff]
    %v1335 = vld [vmem:[%s1294 + $0x140] sm:$0xff]
    %v1336 = vld [vmem:[%s1294 + $0x148] sm:$0xff]
    %v1337 = vld [vmem:[%s1294 + $0x150] sm:$0xff]
    %v1338 = vld [vmem:[%s1294 + $0x158] sm:$0xff]
    %v1339 = vld [vmem:[%s1294 + $0x160] sm:$0xff]
    %v1340 = vld [vmem:[%s1294 + $0x168] sm:$0xff]
    %v1341 = vld [vmem:[%s1294 + $0x170] sm:$0xff]
    %v1342 = vld [vmem:[%s1294 + $0x178] sm:$0xff]
    %v1343 = vld [vmem:[%s1294 + $0x180] sm:$0xff]
    %v1344 = vld [vmem:[%s1294 + $0x188] sm:$0xff]
    %v1345 = vld [vmem:[%s1294 + $0x190] sm:$0xff]
    %v1346 = vld [vmem:[%s1294 + $0x198] sm:$0xff]
    %v1347 = vld [vmem:[%s1294 + $0x1a0] sm:$0xff]
    %v1348 = vld [vmem:[%s1294 + $0x1a8] sm:$0xff]
    %v1349 = vld [vmem:[%s1294 + $0x1b0] sm:$0xff]
    %v1350 = vld [vmem:[%s1294 + $0x1b8] sm:$0xff]
    %v1351 = vld [vmem:[%s1294 + $0x1c0] sm:$0xff]
    %v1352 = vld [vmem:[%s1294 + $0x1c8] sm:$0xff]
    %v1353 = vld [vmem:[%s1294 + $0x1d0] sm:$0xff]
    %v1354 = vld [vmem:[%s1294 + $0x1d8] sm:$0xff]
    %v1355 = vld [vmem:[%s1294 + $0x1e0] sm:$0xff]
    %v1356 = vld [vmem:[%s1294 + $0x1e8] sm:$0xff]
    %v1357 = vld [vmem:[%s1294 + $0x1f0] sm:$0xff]
    %v1358 = vld [vmem:[%s1294 + $0x1f8] sm:$0xff]
    %1359 = vmatprep.subr.mxu0 %v1326
    %1360 = vmatpush1.msra.mxu0 %v1325
    %1361 = vmatprep.subr.mxu0 %v1324
    %1362 = vmatpush1.msra.mxu0 %v1323
    %1363 = vmatprep.subr.mxu0 %v1322
    %1364 = vmatpush1.msra.mxu0 %v1321
    %1365 = vmatprep.subr.mxu0 %v1320
    %1366 = vmatpush1.msra.mxu0 %v1319
    %1367 = vmatprep.subr.mxu0 %v1318
    %1368 = vmatpush1.msra.mxu0 %v1317
    %1369 = vmatprep.subr.mxu0 %v1316
    %1370 = vmatpush1.msra.mxu0 %v1315
    %1371 = vmatprep.subr.mxu0 %v1314
    %1372 = vmatpush1.msra.mxu0 %v1313
    %1373 = vmatprep.subr.mxu0 %v1312
    %1374 = vmatpush1.msra.mxu0 %v1311
    %1375 = vmatprep.subr.mxu0 %v1310
    %1376 = vmatpush1.msra.mxu0 %v1309
    %1377 = vmatprep.subr.mxu0 %v1308
    %1378 = vmatpush1.msra.mxu0 %v1307
    %1379 = vmatprep.subr.mxu0 %v1306
    %1380 = vmatpush1.msra.mxu0 %v1305
    %1381 = vmatprep.subr.mxu0 %v1304
    %1382 = vmatpush1.msra.mxu0 %v1303
    %1383 = vmatprep.subr.mxu0 %v1302
    %1384 = vmatpush1.msra.mxu0 %v1301
    %1385 = vmatprep.subr.mxu0 %v1300
    %1386 = vmatpush1.msra.mxu0 %v1299
    %1387 = vmatprep.subr.mxu0 %v1298
    %1388 = vmatpush1.msra.mxu0 %v1297
    %1389 = vmatprep.subr.mxu0 %v1296
    %1390 = vmatpush1.msra.mxu0 %v1295
    %1391 = vmatprep.subr.mxu0 %v1358
    %1392 = vmatpush2.msra.mxu0 %v1357
    %1393 = vmatprep.subr.mxu0 %v1356
    %1394 = vmatpush2.msra.mxu0 %v1355
    %1395 = vmatprep.subr.mxu0 %v1354
    %1396 = vmatpush2.msra.mxu0 %v1353
    %1397 = vmatprep.subr.mxu0 %v1352
    %1398 = vmatpush2.msra.mxu0 %v1351
    %1399 = vmatprep.subr.mxu0 %v1350
    %1400 = vmatpush2.msra.mxu0 %v1349
    %1401 = vmatprep.subr.mxu0 %v1348
    %1402 = vmatpush2.msra.mxu0 %v1347
    %1403 = vmatprep.subr.mxu0 %v1346
    %1404 = vmatpush2.msra.mxu0 %v1345
    %1405 = vmatprep.subr.mxu0 %v1344
    %1406 = vmatpush2.msra.mxu0 %v1343
    %1407 = vmatprep.subr.mxu0 %v1342
    %1408 = vmatpush2.msra.mxu0 %v1341
    %1409 = vmatprep.subr.mxu0 %v1340
    %1410 = vmatpush2.msra.mxu0 %v1339
    %1411 = vmatprep.subr.mxu0 %v1338
    %1412 = vmatpush2.msra.mxu0 %v1337
    %1413 = vmatprep.subr.mxu0 %v1336
    %1414 = vmatpush2.msra.mxu0 %v1335
    %1415 = vmatprep.subr.mxu0 %v1334
    %1416 = vmatpush2.msra.mxu0 %v1333
    %1417 = vmatprep.subr.mxu0 %v1332
    %1418 = vmatpush2.msra.mxu0 %v1331
    %1419 = vmatprep.subr.mxu0 %v1330
    %1420 = vmatpush2.msra.mxu0 %v1329
    %1421 = vmatprep.subr.mxu0 %v1328
    %1422 = vmatpush2.msra.mxu0 %v1327
    %1423 = vmatprep.mubr.f32.mxu0 %v1293
    %1424 = vmatmul.mubr.f32.gmra.mxu0 %v1292
    %v1425 = vpop.f32.mrf.mxu0
    %v1426 = vadd.f32 0.0, %v1425
    %v1427 = vpop.f32.mrf.mxu0
    %v1428 = vadd.f32 0.0, %v1427
    %1429 = vdwg.mxu0
    %v1430 = vadd.f32 %v1244, %v1426
    %v1431 = vadd.f32 %v1245, %v1428
    %s1432 = scalar_lea.vmem %s16, 4
    %v1433 = vld [vmem:[%s1432] sm:$0x3]
    %v1435 = vlaneseq
    %v1436 = vshrl.u32 %v1435, 7
    %v1437 = vsub.s32 0, %v1436
    %v1438 = vrot.slane %v1433, %v1437
    %v1439 = vlaneseq
    %v1440 = vshrl.u32 %v1439, 7
    %v1441 = vsub.s32 1, %v1440
    %v1442 = vrot.slane %v1433, %v1441
    %v1445 = vadd.f32 %v1430, %v1438
    %v1446 = vadd.f32 %v1431, %v1442
    %v1447 = vld [vmem:[%s17] sm:$0x3]
    %v1448 = vld [vmem:[%s18] sm:$0x3]
    %v1449 = vadd.f32 %v1445, %v1446
    %1450 = vadd.xlane.f32.xlu0 %v1449
    %v1451 = vpop.xlane.xlu0 %1450
    %v1452 = vmul.f32 %v1451, %v852
    %v1453 = vsub.f32 %v1445, %v1452
    %v1454 = vsub.f32 %v1446, %v1452
    %v1455 = vmul.f32 %v1453, %v1453
    %v1456 = vmul.f32 %v1454, %v1454
    %v1457 = vadd.f32 %v1455, %v1456
    %1458 = vadd.xlane.f32.xlu0 %v1457
    %v1459 = vpop.xlane.xlu0 %1458
    %v1460 = vmul.f32 %v1459, %v852
    %v1461 = vadd.f32 %v1460, 1e-05
    %v1462 = vrsqrt.pop %v1461
    %v1463 = vmul.f32 %v1453, %v1462
    %v1464 = vmul.f32 %v1454, %v1462
    %v1466 = vlaneseq
    %v1467 = vshrl.u32 %v1466, 7
    %v1468 = vsub.s32 0, %v1467
    %v1469 = vrot.slane %v1447, %v1468
    %v1470 = vlaneseq
    %v1471 = vshrl.u32 %v1470, 7
    %v1472 = vsub.s32 1, %v1471
    %v1473 = vrot.slane %v1447, %v1472
    %v1476 = vmul.f32 %v1463, %v1469
    %v1477 = vmul.f32 %v1464, %v1473
    %v1479 = vlaneseq
    %v1480 = vshrl.u32 %v1479, 7
    %v1481 = vsub.s32 0, %v1480
    %v1482 = vrot.slane %v1448, %v1481
    %v1483 = vlaneseq
    %v1484 = vshrl.u32 %v1483, 7
    %v1485 = vsub.s32 1, %v1484
    %v1486 = vrot.slane %v1448, %v1485
    %v1489 = vadd.f32 %v1476, %v1482
    %v1490 = vadd.f32 %v1477, %v1486
    %v1491 = vmax.f32 %v1489, 0.0
    %v1492 = vmax.f32 %v1490, 0.0
    %v1493 = vld [vmem:[%s19] sm:$0xff]
    %v1494 = vld [vmem:[%s19 + $0x8] sm:$0xff]
    %v1495 = vld [vmem:[%s19 + $0x10] sm:$0xff]
    %v1496 = vld [vmem:[%s19 + $0x18] sm:$0xff]
    %v1497 = vld [vmem:[%s19 + $0x20] sm:$0xff]
    %v1498 = vld [vmem:[%s19 + $0x28] sm:$0xff]
    %v1499 = vld [vmem:[%s19 + $0x30] sm:$0xff]
    %v1500 = vld [vmem:[%s19 + $0x38] sm:$0xff]
    %v1501 = vld [vmem:[%s19 + $0x40] sm:$0xff]
    %v1502 = vld [vmem:[%s19 + $0x48] sm:$0xff]
    %v1503 = vld [vmem:[%s19 + $0x50] sm:$0xff]
    %v1504 = vld [vmem:[%s19 + $0x58] sm:$0xff]
    %v1505 = vld [vmem:[%s19 + $0x60] sm:$0xff]
    %v1506 = vld [vmem:[%s19 + $0x68] sm:$0xff]
    %v1507 = vld [vmem:[%s19 + $0x70] sm:$0xff]
    %v1508 = vld [vmem:[%s19 + $0x78] sm:$0xff]
    %v1509 = vld [vmem:[%s19 + $0x80] sm:$0xff]
    %v1510 = vld [vmem:[%s19 + $0x88] sm:$0xff]
    %v1511 = vld [vmem:[%s19 + $0x90] sm:$0xff]
    %v1512 = vld [vmem:[%s19 + $0x98] sm:$0xff]
    %v1513 = vld [vmem:[%s19 + $0xa0] sm:$0xff]
    %v1514 = vld [vmem:[%s19 + $0xa8] sm:$0xff]
    %v1515 = vld [vmem:[%s19 + $0xb0] sm:$0xff]
    %v1516 = vld [vmem:[%s19 + $0xb8] sm:$0xff]
    %v1517 = vld [vmem:[%s19 + $0xc0] sm:$0xff]
    %v1518 = vld [vmem:[%s19 + $0xc8] sm:$0xff]
    %v1519 = vld [vmem:[%s19 + $0xd0] sm:$0xff]
    %v1520 = vld [vmem:[%s19 + $0xd8] sm:$0xff]
    %v1521 = vld [vmem:[%s19 + $0xe0] sm:$0xff]
    %v1522 = vld [vmem:[%s19 + $0xe8] sm:$0xff]
    %v1523 = vld [vmem:[%s19 + $0xf0] sm:$0xff]
    %v1524 = vld [vmem:[%s19 + $0xf8] sm:$0xff]
    %v1525 = vld [vmem:[%s20] sm:$0x1]
    %v1527 = vlaneseq
    %v1528 = vshrl.u32 %v1527, 7
    %v1529 = vsub.s32 0, %v1528
    %v1530 = vrot.slane %v1525, %v1529
    %1532 = vmatprep.subr.mxu0 0.0
    %1533 = vmatpush1.msra.mxu0 %v1508
    %1534 = vmatprep.subr.mxu0 0.0
    %1535 = vmatpush1.msra.mxu0 %v1507
    %1536 = vmatprep.subr.mxu0 0.0
    %1537 = vmatpush1.msra.mxu0 %v1506
    %1538 = vmatprep.subr.mxu0 0.0
    %1539 = vmatpush1.msra.mxu0 %v1505
    %1540 = vmatprep.subr.mxu0 0.0
    %1541 = vmatpush1.msra.mxu0 %v1504
    %1542 = vmatprep.subr.mxu0 0.0
    %1543 = vmatpush1.msra.mxu0 %v1503
    %1544 = vmatprep.subr.mxu0 0.0
    %1545 = vmatpush1.msra.mxu0 %v1502
    %1546 = vmatprep.subr.mxu0 0.0
    %1547 = vmatpush1.msra.mxu0 %v1501
    %1548 = vmatprep.subr.mxu0 0.0
    %1549 = vmatpush1.msra.mxu0 %v1500
    %1550 = vmatprep.subr.mxu0 0.0
    %1551 = vmatpush1.msra.mxu0 %v1499
    %1552 = vmatprep.subr.mxu0 0.0
    %1553 = vmatpush1.msra.mxu0 %v1498
    %1554 = vmatprep.subr.mxu0 0.0
    %1555 = vmatpush1.msra.mxu0 %v1497
    %1556 = vmatprep.subr.mxu0 0.0
    %1557 = vmatpush1.msra.mxu0 %v1496
    %1558 = vmatprep.subr.mxu0 0.0
    %1559 = vmatpush1.msra.mxu0 %v1495
    %1560 = vmatprep.subr.mxu0 0.0
    %1561 = vmatpush1.msra.mxu0 %v1494
    %1562 = vmatprep.subr.mxu0 0.0
    %1563 = vmatpush1.msra.mxu0 %v1493
    %1564 = vmatprep.subr.mxu0 0.0
    %1565 = vmatpush2.msra.mxu0 %v1524
    %1566 = vmatprep.subr.mxu0 0.0
    %1567 = vmatpush2.msra.mxu0 %v1523
    %1568 = vmatprep.subr.mxu0 0.0
    %1569 = vmatpush2.msra.mxu0 %v1522
    %1570 = vmatprep.subr.mxu0 0.0
    %1571 = vmatpush2.msra.mxu0 %v1521
    %1572 = vmatprep.subr.mxu0 0.0
    %1573 = vmatpush2.msra.mxu0 %v1520
    %1574 = vmatprep.subr.mxu0 0.0
    %1575 = vmatpush2.msra.mxu0 %v1519
    %1576 = vmatprep.subr.mxu0 0.0
    %1577 = vmatpush2.msra.mxu0 %v1518
    %1578 = vmatprep.subr.mxu0 0.0
    %1579 = vmatpush2.msra.mxu0 %v1517
    %1580 = vmatprep.subr.mxu0 0.0
    %1581 = vmatpush2.msra.mxu0 %v1516
    %1582 = vmatprep.subr.mxu0 0.0
    %1583 = vmatpush2.msra.mxu0 %v1515
    %1584 = vmatprep.subr.mxu0 0.0
    %1585 = vmatpush2.msra.mxu0 %v1514
    %1586 = vmatprep.subr.mxu0 0.0
    %1587 = vmatpush2.msra.mxu0 %v1513
    %1588 = vmatprep.subr.mxu0 0.0
    %1589 = vmatpush2.msra.mxu0 %v1512
    %1590 = vmatprep.subr.mxu0 0.0
    %1591 = vmatpush2.msra.mxu0 %v1511
    %1592 = vmatprep.subr.mxu0 0.0
    %1593 = vmatpush2.msra.mxu0 %v1510
    %1594 = vmatprep.subr.mxu0 0.0
    %1595 = vmatpush2.msra.mxu0 %v1509
    %1596 = vmatprep.mubr.f32.mxu0 %v1492
    %1597 = vmatmul.mubr.f32.gmra.mxu0 %v1491
    %v1598 = vpop.f32.mrf.mxu0
    %v1599 = vadd.f32 %v1530, %v1598
    %v1600 = vpop.f32.mrf.mxu0
    %1601 = vdwg.mxu0
    %vm1602 = vcmask 261120
    %1603 = vst.msk [vmem:[#allocation14] sm:$0xff] %vm1602, %v1599
    // Predicated region
    $region114: #{tpu_custom_call.1} parent=1 // pred_check
      _
    $region115: #{tpu_custom_call.1} parent=1 // pred_check_branch
      %1605 = sbr.rel (0) target = $region117
    $region116: #{tpu_custom_call.1} parent=1 // pred_region
      %s1607 = ssub.s32 128, 128
      %1608 = vsyncadd [#allocation4], %s1607
      %s1610 = sshll.u32 [#allocation14], 4
      %s1611 = int_to_ptr.vmem [resolvable:$true] %s1610
      %1613 = dma.vmem_to_hbm [thread:$0]  %s1611, 128, %s21, [#allocation4]
    $region117: #{tpu_custom_call.1} parent=1 // pred_fallthru
      _
    // Predicated region
    $region118: #{tpu_custom_call.1} parent=1 // pred_check
      _
    $region119: #{tpu_custom_call.1} parent=1 // pred_check_branch
      %1615 = sbr.rel (0) target = $region121
    $region120: #{tpu_custom_call.1} parent=1 // pred_region
      %1616 = dma.done [#allocation4], 128
    $region121: #{tpu_custom_call.1} parent=1 // pred_fallthru
      _
    %1617 = vsyncpa [#allocation3], 1
    %1618 = vsyncpa [#allocation6], 1
    %1619 = vsyncpa [#allocation9], 1
    %1620 = vsyncpa [#allocation12], 1
    %1621 = vsyncpa [#allocation4], 1

</llo_original>
